<compile_context>
chip_gen: v6e
topology: v6e:2x2x1
jax: 0.10.0
libtpu: 0.0.40
codegen_flags: <defaults>
</compile_context>

<pallas_src>
import functools

import jax
import jax.numpy as jnp
from jax.experimental import pallas as pl
from jax.experimental.pallas import tpu as pltpu


def gru_kernel(x_ref, wih_ref, bih_ref, whh_ref, bhn_ref, wo_ref, bo_ref,
               out_ref, h_ref, gi_ref, hs_ref=None, *,
               tc, bb, hd, last_only, unroll):
    """One (batch_block, time_chunk) grid step.

    Kernel-visible shapes (all padded in the wrapper, mxu = dot-operand dtype):
      x_ref   : (tc*bb, F)       mxu   time-major within the chunk
      wih_ref : (F, 3*hd)        mxu   gate-concatenated [r | z | n] input weights
      bih_ref : (1, 3*hd)        f32   b_ih with b_hr/b_hz folded in
      whh_ref : (hd, 3*hd)       mxu   gate-concatenated hidden weights (no bias)
      bhn_ref : (1, hd)          f32   n-gate hidden bias (gated by r)
      wo_ref  : (hd, O_pad)      mxu   head weight
      bo_ref  : (1, O_pad)       f32
      out_ref : (tc*bb, O_pad) or (bb, O_pad) when last_only
      h_ref   : (bb, hd)         f32   hidden-state carry across time chunks
      gi_ref  : (tc*bb, 3*hd)    f32   per-chunk input projections
      hs_ref  : (tc*bb, hd)      f32   per-chunk hidden states (absent if last_only)
    """
    f32 = jnp.float32
    t_chunk = pl.program_id(1)

    @pl.when(t_chunk == 0)
    def _init():
        h_ref[...] = jnp.zeros_like(h_ref)

    # (1) Input projections for the whole chunk: one MXU matmul.
    gi_ref[...] = (
        jnp.dot(x_ref[...], wih_ref[...], preferred_element_type=f32)
        + bih_ref[...])

    whh = whh_ref[...]                                   # resident across the loop
    mxu = whh.dtype
    bhn = jnp.broadcast_to(bhn_ref[...], (bb, hd))       # hoisted out of the loop

    # (2) Sequential recurrence: one fused (bb, hd) @ (hd, 3*hd) matmul per step.
    def step(t, h):
        off = pl.multiple_of(t * bb, 8)
        gi = gi_ref[pl.ds(off, bb), :]
        gh = jnp.dot(h.astype(mxu), whh, preferred_element_type=f32)
        r = jax.nn.sigmoid(gi[:, 0:hd] + gh[:, 0:hd])
        z = jax.nn.sigmoid(gi[:, hd:2 * hd] + gh[:, hd:2 * hd])
        n = jnp.tanh(gi[:, 2 * hd:3 * hd] + r * (gh[:, 2 * hd:3 * hd] + bhn))
        h_new = n + z * (h - n)                          # == (1 - z) * n + z * h
        if not last_only:
            hs_ref[pl.ds(off, bb), :] = h_new
        return h_new

    h_fin = jax.lax.fori_loop(0, tc, step, h_ref[...], unroll=unroll)
    h_ref[...] = h_fin                                   # carry to next time chunk

    # (3) Linear + Tanh head.
    if last_only:
        @pl.when(t_chunk == pl.num_programs(1) - 1)
        def _head():
            out_ref[...] = jnp.tanh(
                jnp.dot(h_fin.astype(mxu), wo_ref[...],
                        preferred_element_type=f32) + bo_ref[...]
            ).astype(out_ref.dtype)
    else:
        out_ref[...] = jnp.tanh(
            jnp.dot(hs_ref[...].astype(mxu), wo_ref[...],
                    preferred_element_type=f32) + bo_ref[...]
        ).astype(out_ref.dtype)


def _round_up(x, m):
    return (x + m - 1) // m * m


def _largest_divisor_leq(n, cap):
    cap = max(1, min(n, cap))
    for d in range(cap, 0, -1):
        if n % d == 0:
            return d
    return 1


@functools.partial(jax.jit, static_argnames=("last_only", "mxu_dtype"))
def my_gru_forward(x, wih, whh, bih, bhh, wo, bo, last_only=False,
                   mxu_dtype=jnp.float32):
    """x: (B, T, F) batch-first, like nn.GRU(batch_first=True).

    Params:
      wih: (3, F, H) stacked [r, z, n] input weights (x @ W layout)
      whh: (3, H, H) stacked hidden weights
      bih: (3, 1, H), bhh: (3, 1, H)
      wo:  (H, O), bo: (1, O)
    Returns (B, T, O), or (B, 1, O) if last_only.
    """
    B, T, F = x.shape
    H = whh.shape[-1]
    O = wo.shape[-1]

    f32 = jnp.float32
    B_pad = _round_up(B, 8)
    H_pad = _round_up(H, 128)
    O_pad = _round_up(O, 128)

    # --- batch blocks: v7x gets 2 TensorCores via the leading "parallel" axis. --
    if B_pad >= 16 and B_pad % 16 == 0:
        n_b, BB = 2, B_pad // 2
    else:
        n_b, BB = 1, B_pad

    # --- time-chunk size against a conservative VMEM budget --------------------
    dot_bytes = jnp.dtype(mxu_dtype).itemsize
    per_t = BB * 3 * H_pad * 4                            # gi scratch (f32)
    per_t += 0 if last_only else BB * H_pad * 4           # hs scratch (f32)
    per_t += 2 * BB * F * dot_bytes                       # x block (double-buffered)
    per_t += 0 if last_only else 2 * BB * O_pad * 4       # out block (double-buffered)
    scratch_budget = 24 * 1024 * 1024
    TC = _largest_divisor_leq(T, max(1, scratch_budget // max(per_t, 1)))
    n_t = T // TC

    fixed = 2 * (F * 3 * H_pad + H_pad * 3 * H_pad + H_pad * O_pad) * dot_bytes
    fixed += 2 * (3 * H_pad + H_pad + O_pad) * 4          # biases
    fixed += BB * H_pad * 4                               # h carry scratch
    fixed += (2 * BB * O_pad * 4) if last_only else 0
    need = fixed + TC * per_t
    vmem_limit = int(min(max(need + (8 << 20), 32 << 20), 50 << 20))

    # --- weight layout prep (zero-padded, gate-concatenated along N) -----------
    def cat_w(w_stack, rows_pad):
        rows = w_stack.shape[1]
        out = jnp.zeros((rows_pad, 3 * H_pad), f32)
        for g in range(3):
            out = out.at[:rows, g * H_pad:g * H_pad + H].set(w_stack[g].astype(f32))
        return out.astype(mxu_dtype)

    wih_cat = cat_w(wih, F)                               # (F, 3*H_pad)
    whh_cat = cat_w(whh, H_pad)                           # (H_pad, 3*H_pad)

    # Fold b_hr / b_hz into the input bias (r, z are sigmoids of a pure sum);
    # only the n-gate hidden bias stays on the per-step path (it is gated by r).
    bih_cat = jnp.zeros((1, 3 * H_pad), f32)
    bih_cat = bih_cat.at[:, 0 * H_pad:0 * H_pad + H].set((bih[0] + bhh[0]).astype(f32))
    bih_cat = bih_cat.at[:, 1 * H_pad:1 * H_pad + H].set((bih[1] + bhh[1]).astype(f32))
    bih_cat = bih_cat.at[:, 2 * H_pad:2 * H_pad + H].set(bih[2].astype(f32))
    bhn = jnp.zeros((1, H_pad), f32).at[:, :H].set(bhh[2].astype(f32))

    wo_pad = jnp.zeros((H_pad, O_pad), f32).at[:H, :O].set(wo.astype(f32))
    wo_pad = wo_pad.astype(mxu_dtype)
    bo_pad = jnp.zeros((1, O_pad), f32).at[:, :O].set(bo.astype(f32))

    # --- activation layout: (batch_block, time*batch_block_rows, F) -------------
    x_tm = jnp.transpose(x.astype(f32), (1, 0, 2))                  # (T, B, F)
    x_tm = jnp.pad(x_tm, ((0, 0), (0, B_pad - B), (0, 0)))          # (T, B_pad, F)
    x_blk = (x_tm.reshape(T, n_b, BB, F).transpose(1, 0, 2, 3)
             .reshape(n_b, T * BB, F).astype(mxu_dtype))

    def invariant(shape):
        return pl.BlockSpec(shape, lambda b, t: (0,) * len(shape))

    in_specs = [
        pl.BlockSpec((pl.Squeezed(), TC * BB, F), lambda b, t: (b, t, 0)),
        invariant(wih_cat.shape),
        invariant(bih_cat.shape),
        invariant(whh_cat.shape),
        invariant(bhn.shape),
        invariant(wo_pad.shape),
        invariant(bo_pad.shape),
    ]

    if last_only:
        out_shape = jax.ShapeDtypeStruct((n_b, BB, O_pad), f32)
        out_specs = pl.BlockSpec((pl.Squeezed(), BB, O_pad), lambda b, t: (b, 0, 0))
    else:
        out_shape = jax.ShapeDtypeStruct((n_b, T * BB, O_pad), f32)
        out_specs = pl.BlockSpec((pl.Squeezed(), TC * BB, O_pad),
                                 lambda b, t: (b, t, 0))

    scratch = [
        pltpu.VMEM((BB, H_pad), f32),                     # h carry across chunks
        pltpu.VMEM((TC * BB, 3 * H_pad), f32),            # gi for the current chunk
    ]
    if not last_only:
        scratch.append(pltpu.VMEM((TC * BB, H_pad), f32))  # h_t for the chunk

    kernel = functools.partial(
        gru_kernel, tc=TC, bb=BB, hd=H_pad, last_only=last_only,
        unroll=(TC <= 32))

    out_raw = pl.pallas_call(
        kernel,
        out_shape=out_shape,
        grid=(n_b, n_t),
        in_specs=in_specs,
        out_specs=out_specs,
        scratch_shapes=scratch,
        compiler_params=pltpu.CompilerParams(
            dimension_semantics=("parallel", "arbitrary"),
            vmem_limit_bytes=vmem_limit),
    )(x_blk, wih_cat, bih_cat, whh_cat, bhn, wo_pad, bo_pad)

    if last_only:
        out = out_raw.reshape(B_pad, O_pad)[:B, :O].reshape(B, 1, O)
    else:
        out = (out_raw.reshape(n_b, T, BB, O_pad).transpose(1, 0, 2, 3)
               .reshape(T, B_pad, O_pad)[:, :B, :O].transpose(1, 0, 2))
    return out


def gru_reference(x, wih, whh, bih, bhh, wo, bo):
    """Pure-JAX reference with identical GRU semantics (for verification)."""
    B, T, F = x.shape
    H = whh.shape[-1]

    def step(h, x_t):
        gi = jnp.stack([x_t @ wih[g] + bih[g, 0] for g in range(3)])
        gh = jnp.stack([h @ whh[g] + bhh[g, 0] for g in range(3)])
        r = jax.nn.sigmoid(gi[0] + gh[0])
        z = jax.nn.sigmoid(gi[1] + gh[1])
        n = jnp.tanh(gi[2] + r * gh[2])
        h_new = (1.0 - z) * n + z * h
        return h_new, h_new

    h0 = jnp.zeros((B, H), jnp.float32)
    _, hs = jax.lax.scan(step, h0, jnp.transpose(x, (1, 0, 2)))      # (T, B, H)
    hs = jnp.transpose(hs, (1, 0, 2))                                # (B, T, H)
    return jnp.tanh(hs @ wo + bo[0])


if __name__ == "__main__":
    # Small shapes consistent with the module: featSize=4, hidden=32, outputSize=1.
    B, T, F, H, O = 2, 8, 4, 32, 1

    key = jax.random.PRNGKey(0)
    ks = jax.random.split(key, 7)
    bound = 1.0 / jnp.sqrt(H)  # torch.nn.GRU / Linear default init range

    # Stacked gate weights, already transposed for x @ W layout.
    wih = jax.random.uniform(ks[0], (3, F, H), jnp.float32, -bound, bound)
    whh = jax.random.uniform(ks[1], (3, H, H), jnp.float32, -bound, bound)
    bih = jax.random.uniform(ks[2], (3, 1, H), jnp.float32, -bound, bound)
    bhh = jax.random.uniform(ks[3], (3, 1, H), jnp.float32, -bound, bound)
    wo = jax.random.uniform(ks[4], (H, O), jnp.float32, -bound, bound)
    bo = jax.random.uniform(ks[5], (1, O), jnp.float32, -bound, bound)

    x = jax.random.normal(ks[6], (B, T, F), jnp.float32)

    ref = gru_reference(x, wih, whh, bih, bhh, wo, bo)

    # 1) f32 MXU path (exact parity with the f32 reference).
    out = jax.block_until_ready(
        my_gru_forward(x, wih, whh, bih, bhh, wo, bo, last_only=False))
    assert out.shape == (B, T, O), out.shape
    assert jnp.allclose(out, ref, atol=5e-5, rtol=5e-5), (
        float(jnp.max(jnp.abs(out - ref))))

    # 2) lastOnly=True specialization: equals the last timestep of the full output.
    out_last = jax.block_until_ready(
        my_gru_forward(x, wih, whh, bih, bhh, wo, bo, last_only=True))
    assert out_last.shape == (B, 1, O), out_last.shape
    assert jnp.allclose(out_last, ref[:, -1:, :], atol=5e-5, rtol=5e-5), (
        float(jnp.max(jnp.abs(out_last - ref[:, -1:, :]))))

    # 3) bf16 MXU operands (v6e/v7x fast path); gate math stays f32.
    out_bf16 = jax.block_until_ready(
        my_gru_forward(x, wih, whh, bih, bhh, wo, bo, last_only=False,
                       mxu_dtype=jnp.bfloat16))
    assert jnp.allclose(out_bf16, ref, atol=5e-2, rtol=5e-2), (
        float(jnp.max(jnp.abs(out_bf16 - ref))))

    print("KERNEL_OK")
</pallas_src>

<mosaic_0001>
module attributes {stable_mosaic.version = 11 : i64} {
  func.func @gru_kernel(%arg0: i32, %arg1: i32, %arg2: memref<1x64x4xf32, #tpu.memory_space<vmem>>, %arg3: memref<4x384xf32, #tpu.memory_space<vmem>>, %arg4: memref<1x384xf32, #tpu.memory_space<vmem>>, %arg5: memref<128x384xf32, #tpu.memory_space<vmem>>, %arg6: memref<1x128xf32, #tpu.memory_space<vmem>>, %arg7: memref<128x128xf32, #tpu.memory_space<vmem>>, %arg8: memref<1x128xf32, #tpu.memory_space<vmem>>, %arg9: memref<1x64x128xf32, #tpu.memory_space<vmem>>, %arg10: memref<8x128xf32, #tpu.memory_space<vmem>>, %arg11: memref<64x384xf32, #tpu.memory_space<vmem>>, %arg12: memref<64x128xf32, #tpu.memory_space<vmem>>) attributes {dimension_semantics = [#tpu.dimension_semantics<parallel>, #tpu.dimension_semantics<arbitrary>], iteration_bounds = array<i64: 1, 1>, scalar_prefetch = 0 : i64, scratch_operands = 3 : i64, tpu.core_type = #tpu.core_type<tc>, window_params = [{transform_indices = @transform_0, window_bounds = array<i64: 1, 64, 4>}, {pipeline_mode = #tpu.pipeline_mode<synchronous>, transform_indices = @transform_1, window_bounds = array<i64: 4, 384>}, {pipeline_mode = #tpu.pipeline_mode<synchronous>, transform_indices = @transform_2, window_bounds = array<i64: 1, 384>}, {pipeline_mode = #tpu.pipeline_mode<synchronous>, transform_indices = @transform_3, window_bounds = array<i64: 128, 384>}, {pipeline_mode = #tpu.pipeline_mode<synchronous>, transform_indices = @transform_4, window_bounds = array<i64: 1, 128>}, {pipeline_mode = #tpu.pipeline_mode<synchronous>, transform_indices = @transform_5, window_bounds = array<i64: 128, 128>}, {pipeline_mode = #tpu.pipeline_mode<synchronous>, transform_indices = @transform_6, window_bounds = array<i64: 1, 128>}, {transform_indices = @transform_7, window_bounds = array<i64: 1, 64, 128>}]} {
    %c0_i32 = arith.constant 0 : i32
    %0 = arith.cmpi eq, %arg1, %c0_i32 : i32
    %1 = arith.extui %0 : i1 to i32
    %c0_i32_0 = arith.constant 0 : i32
    %2 = arith.cmpi ne, %1, %c0_i32_0 : i32
    scf.if %2 {
      %cst_76 = arith.constant 0.000000e+00 : f32
      %283 = vector.broadcast %cst_76 : f32 to vector<8x128xf32>
      %c0_77 = arith.constant 0 : index
      %c0_78 = arith.constant 0 : index
      %284 = vector.load %arg10[%c0_77, %c0_78] : memref<8x128xf32, #tpu.memory_space<vmem>>, vector<8x128xf32>
      tpu.vector_store %arg10[%c0_77, %c0_78], %283 {strides = array<i32>} : memref<8x128xf32, #tpu.memory_space<vmem>>, vector<8x128xf32>,
    } else {
    }
    %c0 = arith.constant 0 : index
    %c0_1 = arith.constant 0 : index
    %c0_2 = arith.constant 0 : index
    %3 = vector.load %arg2[%c0, %c0_1, %c0_2] : memref<1x64x4xf32, #tpu.memory_space<vmem>>, vector<1x64x4xf32>
    %4 = vector.shape_cast %3 : vector<1x64x4xf32> to vector<64x4xf32>
    %c0_3 = arith.constant 0 : index
    %c0_4 = arith.constant 0 : index
    %5 = vector.load %arg3[%c0_3, %c0_4] : memref<4x384xf32, #tpu.memory_space<vmem>>, vector<4x384xf32>
    %cst = arith.constant dense<0.000000e+00> : vector<64x384xf32>
    %6 = tpu.matmul %4, %5, %cst {dimension_numbers = #tpu.dot_dimension_numbers<[1], [0], [0], [1], [0, 0, 1, 1], [], []>} : vector<64x4xf32>, vector<4x384xf32>, vector<64x384xf32> -> vector<64x384xf32>
    %c0_5 = arith.constant 0 : index
    %c0_6 = arith.constant 0 : index
    %7 = vector.load %arg4[%c0_5, %c0_6] : memref<1x384xf32, #tpu.memory_space<vmem>>, vector<1x384xf32>
    %8 = vector.broadcast %7 : vector<1x384xf32> to vector<64x384xf32>
    %9 = arith.addf %6, %8 : vector<64x384xf32>
    %c0_7 = arith.constant 0 : index
    %c0_8 = arith.constant 0 : index
    %10 = vector.load %arg11[%c0_7, %c0_8] : memref<64x384xf32, #tpu.memory_space<vmem>>, vector<64x384xf32>
    tpu.vector_store %arg11[%c0_7, %c0_8], %9 {strides = array<i32>} : memref<64x384xf32, #tpu.memory_space<vmem>>, vector<64x384xf32>,
    %c0_9 = arith.constant 0 : index
    %c0_10 = arith.constant 0 : index
    %11 = vector.load %arg5[%c0_9, %c0_10] : memref<128x384xf32, #tpu.memory_space<vmem>>, vector<128x384xf32>
    %c0_11 = arith.constant 0 : index
    %c0_12 = arith.constant 0 : index
    %12 = vector.load %arg6[%c0_11, %c0_12] : memref<1x128xf32, #tpu.memory_space<vmem>>, vector<1x128xf32>
    %13 = vector.shape_cast %12 : vector<1x128xf32> to vector<1x128xf32>
    %14 = vector.broadcast %13 : vector<1x128xf32> to vector<8x128xf32>
    %c0_13 = arith.constant 0 : index
    %c0_14 = arith.constant 0 : index
    %15 = vector.load %arg10[%c0_13, %c0_14] : memref<8x128xf32, #tpu.memory_space<vmem>>, vector<8x128xf32>
    %c0_i32_15 = arith.constant 0 : i32
    %c8_i32 = arith.constant 8 : i32
    %16 = arith.muli %c0_i32_15, %c8_i32 : i32
    %17 = tpu.assume_multiple %16, 8 : i32
    %18 = arith.index_cast %17 : i32 to index
    %c0_16 = arith.constant 0 : index
    %19 = vector.load %arg11[%18, %c0_16] : memref<64x384xf32, #tpu.memory_space<vmem>>, vector<8x384xf32>
    %cst_17 = arith.constant dense<0.000000e+00> : vector<8x384xf32>
    %20 = tpu.matmul %15, %11, %cst_17 {dimension_numbers = #tpu.dot_dimension_numbers<[1], [0], [0], [1], [0, 0, 1, 1], [], []>} : vector<8x128xf32>, vector<128x384xf32>, vector<8x384xf32> -> vector<8x384xf32>
    %21 = vector.extract_strided_slice %19 {offsets = [0, 0], sizes = [8, 128], strides = [1, 1]} : vector<8x384xf32> to vector<8x128xf32>
    %22 = vector.extract_strided_slice %20 {offsets = [0, 0], sizes = [8, 128], strides = [1, 1]} : vector<8x384xf32> to vector<8x128xf32>
    %23 = arith.addf %21, %22 : vector<8x128xf32>
    %24 = arith.negf %23 : vector<8x128xf32>
    %25 = math.exp %24 : vector<8x128xf32>
    %cst_18 = arith.constant 1.000000e+00 : f32
    %26 = vector.broadcast %cst_18 : f32 to vector<8x128xf32>
    %27 = arith.addf %26, %25 : vector<8x128xf32>
    %28 = arith.divf %26, %27 : vector<8x128xf32>
    %29 = vector.extract_strided_slice %19 {offsets = [0, 128], sizes = [8, 128], strides = [1, 1]} : vector<8x384xf32> to vector<8x128xf32>
    %30 = vector.extract_strided_slice %20 {offsets = [0, 128], sizes = [8, 128], strides = [1, 1]} : vector<8x384xf32> to vector<8x128xf32>
    %31 = arith.addf %29, %30 : vector<8x128xf32>
    %32 = arith.negf %31 : vector<8x128xf32>
    %33 = math.exp %32 : vector<8x128xf32>
    %cst_19 = arith.constant 1.000000e+00 : f32
    %34 = vector.broadcast %cst_19 : f32 to vector<8x128xf32>
    %35 = arith.addf %34, %33 : vector<8x128xf32>
    %36 = arith.divf %34, %35 : vector<8x128xf32>
    %37 = vector.extract_strided_slice %19 {offsets = [0, 256], sizes = [8, 128], strides = [1, 1]} : vector<8x384xf32> to vector<8x128xf32>
    %38 = vector.extract_strided_slice %20 {offsets = [0, 256], sizes = [8, 128], strides = [1, 1]} : vector<8x384xf32> to vector<8x128xf32>
    %39 = arith.addf %38, %14 : vector<8x128xf32>
    %40 = arith.mulf %28, %39 : vector<8x128xf32>
    %41 = arith.addf %37, %40 : vector<8x128xf32>
    %42 = math.tanh %41 : vector<8x128xf32>
    %43 = arith.subf %15, %42 : vector<8x128xf32>
    %44 = arith.mulf %36, %43 : vector<8x128xf32>
    %45 = arith.addf %42, %44 : vector<8x128xf32>
    %46 = arith.index_cast %17 : i32 to index
    %c0_20 = arith.constant 0 : index
    %47 = vector.load %arg12[%46, %c0_20] : memref<64x128xf32, #tpu.memory_space<vmem>>, vector<8x128xf32>
    tpu.vector_store %arg12[%46, %c0_20], %45 {strides = array<i32>} : memref<64x128xf32, #tpu.memory_space<vmem>>, vector<8x128xf32>,
    %c1_i32 = arith.constant 1 : i32
    %c8_i32_21 = arith.constant 8 : i32
    %48 = arith.muli %c1_i32, %c8_i32_21 : i32
    %49 = tpu.assume_multiple %48, 8 : i32
    %50 = arith.index_cast %49 : i32 to index
    %c0_22 = arith.constant 0 : index
    %51 = vector.load %arg11[%50, %c0_22] : memref<64x384xf32, #tpu.memory_space<vmem>>, vector<8x384xf32>
    %cst_23 = arith.constant dense<0.000000e+00> : vector<8x384xf32>
    %52 = tpu.matmul %45, %11, %cst_23 {dimension_numbers = #tpu.dot_dimension_numbers<[1], [0], [0], [1], [0, 0, 1, 1], [], []>} : vector<8x128xf32>, vector<128x384xf32>, vector<8x384xf32> -> vector<8x384xf32>
    %53 = vector.extract_strided_slice %51 {offsets = [0, 0], sizes = [8, 128], strides = [1, 1]} : vector<8x384xf32> to vector<8x128xf32>
    %54 = vector.extract_strided_slice %52 {offsets = [0, 0], sizes = [8, 128], strides = [1, 1]} : vector<8x384xf32> to vector<8x128xf32>
    %55 = arith.addf %53, %54 : vector<8x128xf32>
    %56 = arith.negf %55 : vector<8x128xf32>
    %57 = math.exp %56 : vector<8x128xf32>
    %cst_24 = arith.constant 1.000000e+00 : f32
    %58 = vector.broadcast %cst_24 : f32 to vector<8x128xf32>
    %59 = arith.addf %58, %57 : vector<8x128xf32>
    %60 = arith.divf %58, %59 : vector<8x128xf32>
    %61 = vector.extract_strided_slice %51 {offsets = [0, 128], sizes = [8, 128], strides = [1, 1]} : vector<8x384xf32> to vector<8x128xf32>
    %62 = vector.extract_strided_slice %52 {offsets = [0, 128], sizes = [8, 128], strides = [1, 1]} : vector<8x384xf32> to vector<8x128xf32>
    %63 = arith.addf %61, %62 : vector<8x128xf32>
    %64 = arith.negf %63 : vector<8x128xf32>
    %65 = math.exp %64 : vector<8x128xf32>
    %cst_25 = arith.constant 1.000000e+00 : f32
    %66 = vector.broadcast %cst_25 : f32 to vector<8x128xf32>
    %67 = arith.addf %66, %65 : vector<8x128xf32>
    %68 = arith.divf %66, %67 : vector<8x128xf32>
    %69 = vector.extract_strided_slice %51 {offsets = [0, 256], sizes = [8, 128], strides = [1, 1]} : vector<8x384xf32> to vector<8x128xf32>
    %70 = vector.extract_strided_slice %52 {offsets = [0, 256], sizes = [8, 128], strides = [1, 1]} : vector<8x384xf32> to vector<8x128xf32>
    %71 = arith.addf %70, %14 : vector<8x128xf32>
    %72 = arith.mulf %60, %71 : vector<8x128xf32>
    %73 = arith.addf %69, %72 : vector<8x128xf32>
    %74 = math.tanh %73 : vector<8x128xf32>
    %75 = arith.subf %45, %74 : vector<8x128xf32>
    %76 = arith.mulf %68, %75 : vector<8x128xf32>
    %77 = arith.addf %74, %76 : vector<8x128xf32>
    %78 = arith.index_cast %49 : i32 to index
    %c0_26 = arith.constant 0 : index
    %79 = vector.load %arg12[%78, %c0_26] : memref<64x128xf32, #tpu.memory_space<vmem>>, vector<8x128xf32>
    tpu.vector_store %arg12[%78, %c0_26], %77 {strides = array<i32>} : memref<64x128xf32, #tpu.memory_space<vmem>>, vector<8x128xf32>,
    %c2_i32 = arith.constant 2 : i32
    %c8_i32_27 = arith.constant 8 : i32
    %80 = arith.muli %c2_i32, %c8_i32_27 : i32
    %81 = tpu.assume_multiple %80, 8 : i32
    %82 = arith.index_cast %81 : i32 to index
    %c0_28 = arith.constant 0 : index
    %83 = vector.load %arg11[%82, %c0_28] : memref<64x384xf32, #tpu.memory_space<vmem>>, vector<8x384xf32>
    %cst_29 = arith.constant dense<0.000000e+00> : vector<8x384xf32>
    %84 = tpu.matmul %77, %11, %cst_29 {dimension_numbers = #tpu.dot_dimension_numbers<[1], [0], [0], [1], [0, 0, 1, 1], [], []>} : vector<8x128xf32>, vector<128x384xf32>, vector<8x384xf32> -> vector<8x384xf32>
    %85 = vector.extract_strided_slice %83 {offsets = [0, 0], sizes = [8, 128], strides = [1, 1]} : vector<8x384xf32> to vector<8x128xf32>
    %86 = vector.extract_strided_slice %84 {offsets = [0, 0], sizes = [8, 128], strides = [1, 1]} : vector<8x384xf32> to vector<8x128xf32>
    %87 = arith.addf %85, %86 : vector<8x128xf32>
    %88 = arith.negf %87 : vector<8x128xf32>
    %89 = math.exp %88 : vector<8x128xf32>
    %cst_30 = arith.constant 1.000000e+00 : f32
    %90 = vector.broadcast %cst_30 : f32 to vector<8x128xf32>
    %91 = arith.addf %90, %89 : vector<8x128xf32>
    %92 = arith.divf %90, %91 : vector<8x128xf32>
    %93 = vector.extract_strided_slice %83 {offsets = [0, 128], sizes = [8, 128], strides = [1, 1]} : vector<8x384xf32> to vector<8x128xf32>
    %94 = vector.extract_strided_slice %84 {offsets = [0, 128], sizes = [8, 128], strides = [1, 1]} : vector<8x384xf32> to vector<8x128xf32>
    %95 = arith.addf %93, %94 : vector<8x128xf32>
    %96 = arith.negf %95 : vector<8x128xf32>
    %97 = math.exp %96 : vector<8x128xf32>
    %cst_31 = arith.constant 1.000000e+00 : f32
    %98 = vector.broadcast %cst_31 : f32 to vector<8x128xf32>
    %99 = arith.addf %98, %97 : vector<8x128xf32>
    %100 = arith.divf %98, %99 : vector<8x128xf32>
    %101 = vector.extract_strided_slice %83 {offsets = [0, 256], sizes = [8, 128], strides = [1, 1]} : vector<8x384xf32> to vector<8x128xf32>
    %102 = vector.extract_strided_slice %84 {offsets = [0, 256], sizes = [8, 128], strides = [1, 1]} : vector<8x384xf32> to vector<8x128xf32>
    %103 = arith.addf %102, %14 : vector<8x128xf32>
    %104 = arith.mulf %92, %103 : vector<8x128xf32>
    %105 = arith.addf %101, %104 : vector<8x128xf32>
    %106 = math.tanh %105 : vector<8x128xf32>
    %107 = arith.subf %77, %106 : vector<8x128xf32>
    %108 = arith.mulf %100, %107 : vector<8x128xf32>
    %109 = arith.addf %106, %108 : vector<8x128xf32>
    %110 = arith.index_cast %81 : i32 to index
    %c0_32 = arith.constant 0 : index
    %111 = vector.load %arg12[%110, %c0_32] : memref<64x128xf32, #tpu.memory_space<vmem>>, vector<8x128xf32>
    tpu.vector_store %arg12[%110, %c0_32], %109 {strides = array<i32>} : memref<64x128xf32, #tpu.memory_space<vmem>>, vector<8x128xf32>,
    %c3_i32 = arith.constant 3 : i32
    %c8_i32_33 = arith.constant 8 : i32
    %112 = arith.muli %c3_i32, %c8_i32_33 : i32
    %113 = tpu.assume_multiple %112, 8 : i32
    %114 = arith.index_cast %113 : i32 to index
    %c0_34 = arith.constant 0 : index
    %115 = vector.load %arg11[%114, %c0_34] : memref<64x384xf32, #tpu.memory_space<vmem>>, vector<8x384xf32>
    %cst_35 = arith.constant dense<0.000000e+00> : vector<8x384xf32>
    %116 = tpu.matmul %109, %11, %cst_35 {dimension_numbers = #tpu.dot_dimension_numbers<[1], [0], [0], [1], [0, 0, 1, 1], [], []>} : vector<8x128xf32>, vector<128x384xf32>, vector<8x384xf32> -> vector<8x384xf32>
    %117 = vector.extract_strided_slice %115 {offsets = [0, 0], sizes = [8, 128], strides = [1, 1]} : vector<8x384xf32> to vector<8x128xf32>
    %118 = vector.extract_strided_slice %116 {offsets = [0, 0], sizes = [8, 128], strides = [1, 1]} : vector<8x384xf32> to vector<8x128xf32>
    %119 = arith.addf %117, %118 : vector<8x128xf32>
    %120 = arith.negf %119 : vector<8x128xf32>
    %121 = math.exp %120 : vector<8x128xf32>
    %cst_36 = arith.constant 1.000000e+00 : f32
    %122 = vector.broadcast %cst_36 : f32 to vector<8x128xf32>
    %123 = arith.addf %122, %121 : vector<8x128xf32>
    %124 = arith.divf %122, %123 : vector<8x128xf32>
    %125 = vector.extract_strided_slice %115 {offsets = [0, 128], sizes = [8, 128], strides = [1, 1]} : vector<8x384xf32> to vector<8x128xf32>
    %126 = vector.extract_strided_slice %116 {offsets = [0, 128], sizes = [8, 128], strides = [1, 1]} : vector<8x384xf32> to vector<8x128xf32>
    %127 = arith.addf %125, %126 : vector<8x128xf32>
    %128 = arith.negf %127 : vector<8x128xf32>
    %129 = math.exp %128 : vector<8x128xf32>
    %cst_37 = arith.constant 1.000000e+00 : f32
    %130 = vector.broadcast %cst_37 : f32 to vector<8x128xf32>
    %131 = arith.addf %130, %129 : vector<8x128xf32>
    %132 = arith.divf %130, %131 : vector<8x128xf32>
    %133 = vector.extract_strided_slice %115 {offsets = [0, 256], sizes = [8, 128], strides = [1, 1]} : vector<8x384xf32> to vector<8x128xf32>
    %134 = vector.extract_strided_slice %116 {offsets = [0, 256], sizes = [8, 128], strides = [1, 1]} : vector<8x384xf32> to vector<8x128xf32>
    %135 = arith.addf %134, %14 : vector<8x128xf32>
    %136 = arith.mulf %124, %135 : vector<8x128xf32>
    %137 = arith.addf %133, %136 : vector<8x128xf32>
    %138 = math.tanh %137 : vector<8x128xf32>
    %139 = arith.subf %109, %138 : vector<8x128xf32>
    %140 = arith.mulf %132, %139 : vector<8x128xf32>
    %141 = arith.addf %138, %140 : vector<8x128xf32>
    %142 = arith.index_cast %113 : i32 to index
    %c0_38 = arith.constant 0 : index
    %143 = vector.load %arg12[%142, %c0_38] : memref<64x128xf32, #tpu.memory_space<vmem>>, vector<8x128xf32>
    tpu.vector_store %arg12[%142, %c0_38], %141 {strides = array<i32>} : memref<64x128xf32, #tpu.memory_space<vmem>>, vector<8x128xf32>,
    %c4_i32 = arith.constant 4 : i32
    %c8_i32_39 = arith.constant 8 : i32
    %144 = arith.muli %c4_i32, %c8_i32_39 : i32
    %145 = tpu.assume_multiple %144, 8 : i32
    %146 = arith.index_cast %145 : i32 to index
    %c0_40 = arith.constant 0 : index
    %147 = vector.load %arg11[%146, %c0_40] : memref<64x384xf32, #tpu.memory_space<vmem>>, vector<8x384xf32>
    %cst_41 = arith.constant dense<0.000000e+00> : vector<8x384xf32>
    %148 = tpu.matmul %141, %11, %cst_41 {dimension_numbers = #tpu.dot_dimension_numbers<[1], [0], [0], [1], [0, 0, 1, 1], [], []>} : vector<8x128xf32>, vector<128x384xf32>, vector<8x384xf32> -> vector<8x384xf32>
    %149 = vector.extract_strided_slice %147 {offsets = [0, 0], sizes = [8, 128], strides = [1, 1]} : vector<8x384xf32> to vector<8x128xf32>
    %150 = vector.extract_strided_slice %148 {offsets = [0, 0], sizes = [8, 128], strides = [1, 1]} : vector<8x384xf32> to vector<8x128xf32>
    %151 = arith.addf %149, %150 : vector<8x128xf32>
    %152 = arith.negf %151 : vector<8x128xf32>
    %153 = math.exp %152 : vector<8x128xf32>
    %cst_42 = arith.constant 1.000000e+00 : f32
    %154 = vector.broadcast %cst_42 : f32 to vector<8x128xf32>
    %155 = arith.addf %154, %153 : vector<8x128xf32>
    %156 = arith.divf %154, %155 : vector<8x128xf32>
    %157 = vector.extract_strided_slice %147 {offsets = [0, 128], sizes = [8, 128], strides = [1, 1]} : vector<8x384xf32> to vector<8x128xf32>
    %158 = vector.extract_strided_slice %148 {offsets = [0, 128], sizes = [8, 128], strides = [1, 1]} : vector<8x384xf32> to vector<8x128xf32>
    %159 = arith.addf %157, %158 : vector<8x128xf32>
    %160 = arith.negf %159 : vector<8x128xf32>
    %161 = math.exp %160 : vector<8x128xf32>
    %cst_43 = arith.constant 1.000000e+00 : f32
    %162 = vector.broadcast %cst_43 : f32 to vector<8x128xf32>
    %163 = arith.addf %162, %161 : vector<8x128xf32>
    %164 = arith.divf %162, %163 : vector<8x128xf32>
    %165 = vector.extract_strided_slice %147 {offsets = [0, 256], sizes = [8, 128], strides = [1, 1]} : vector<8x384xf32> to vector<8x128xf32>
    %166 = vector.extract_strided_slice %148 {offsets = [0, 256], sizes = [8, 128], strides = [1, 1]} : vector<8x384xf32> to vector<8x128xf32>
    %167 = arith.addf %166, %14 : vector<8x128xf32>
    %168 = arith.mulf %156, %167 : vector<8x128xf32>
    %169 = arith.addf %165, %168 : vector<8x128xf32>
    %170 = math.tanh %169 : vector<8x128xf32>
    %171 = arith.subf %141, %170 : vector<8x128xf32>
    %172 = arith.mulf %164, %171 : vector<8x128xf32>
    %173 = arith.addf %170, %172 : vector<8x128xf32>
    %174 = arith.index_cast %145 : i32 to index
    %c0_44 = arith.constant 0 : index
    %175 = vector.load %arg12[%174, %c0_44] : memref<64x128xf32, #tpu.memory_space<vmem>>, vector<8x128xf32>
    tpu.vector_store %arg12[%174, %c0_44], %173 {strides = array<i32>} : memref<64x128xf32, #tpu.memory_space<vmem>>, vector<8x128xf32>,
    %c5_i32 = arith.constant 5 : i32
    %c8_i32_45 = arith.constant 8 : i32
    %176 = arith.muli %c5_i32, %c8_i32_45 : i32
    %177 = tpu.assume_multiple %176, 8 : i32
    %178 = arith.index_cast %177 : i32 to index
    %c0_46 = arith.constant 0 : index
    %179 = vector.load %arg11[%178, %c0_46] : memref<64x384xf32, #tpu.memory_space<vmem>>, vector<8x384xf32>
    %cst_47 = arith.constant dense<0.000000e+00> : vector<8x384xf32>
    %180 = tpu.matmul %173, %11, %cst_47 {dimension_numbers = #tpu.dot_dimension_numbers<[1], [0], [0], [1], [0, 0, 1, 1], [], []>} : vector<8x128xf32>, vector<128x384xf32>, vector<8x384xf32> -> vector<8x384xf32>
    %181 = vector.extract_strided_slice %179 {offsets = [0, 0], sizes = [8, 128], strides = [1, 1]} : vector<8x384xf32> to vector<8x128xf32>
    %182 = vector.extract_strided_slice %180 {offsets = [0, 0], sizes = [8, 128], strides = [1, 1]} : vector<8x384xf32> to vector<8x128xf32>
    %183 = arith.addf %181, %182 : vector<8x128xf32>
    %184 = arith.negf %183 : vector<8x128xf32>
    %185 = math.exp %184 : vector<8x128xf32>
    %cst_48 = arith.constant 1.000000e+00 : f32
    %186 = vector.broadcast %cst_48 : f32 to vector<8x128xf32>
    %187 = arith.addf %186, %185 : vector<8x128xf32>
    %188 = arith.divf %186, %187 : vector<8x128xf32>
    %189 = vector.extract_strided_slice %179 {offsets = [0, 128], sizes = [8, 128], strides = [1, 1]} : vector<8x384xf32> to vector<8x128xf32>
    %190 = vector.extract_strided_slice %180 {offsets = [0, 128], sizes = [8, 128], strides = [1, 1]} : vector<8x384xf32> to vector<8x128xf32>
    %191 = arith.addf %189, %190 : vector<8x128xf32>
    %192 = arith.negf %191 : vector<8x128xf32>
    %193 = math.exp %192 : vector<8x128xf32>
    %cst_49 = arith.constant 1.000000e+00 : f32
    %194 = vector.broadcast %cst_49 : f32 to vector<8x128xf32>
    %195 = arith.addf %194, %193 : vector<8x128xf32>
    %196 = arith.divf %194, %195 : vector<8x128xf32>
    %197 = vector.extract_strided_slice %179 {offsets = [0, 256], sizes = [8, 128], strides = [1, 1]} : vector<8x384xf32> to vector<8x128xf32>
    %198 = vector.extract_strided_slice %180 {offsets = [0, 256], sizes = [8, 128], strides = [1, 1]} : vector<8x384xf32> to vector<8x128xf32>
    %199 = arith.addf %198, %14 : vector<8x128xf32>
    %200 = arith.mulf %188, %199 : vector<8x128xf32>
    %201 = arith.addf %197, %200 : vector<8x128xf32>
    %202 = math.tanh %201 : vector<8x128xf32>
    %203 = arith.subf %173, %202 : vector<8x128xf32>
    %204 = arith.mulf %196, %203 : vector<8x128xf32>
    %205 = arith.addf %202, %204 : vector<8x128xf32>
    %206 = arith.index_cast %177 : i32 to index
    %c0_50 = arith.constant 0 : index
    %207 = vector.load %arg12[%206, %c0_50] : memref<64x128xf32, #tpu.memory_space<vmem>>, vector<8x128xf32>
    tpu.vector_store %arg12[%206, %c0_50], %205 {strides = array<i32>} : memref<64x128xf32, #tpu.memory_space<vmem>>, vector<8x128xf32>,
    %c6_i32 = arith.constant 6 : i32
    %c8_i32_51 = arith.constant 8 : i32
    %208 = arith.muli %c6_i32, %c8_i32_51 : i32
    %209 = tpu.assume_multiple %208, 8 : i32
    %210 = arith.index_cast %209 : i32 to index
    %c0_52 = arith.constant 0 : index
    %211 = vector.load %arg11[%210, %c0_52] : memref<64x384xf32, #tpu.memory_space<vmem>>, vector<8x384xf32>
    %cst_53 = arith.constant dense<0.000000e+00> : vector<8x384xf32>
    %212 = tpu.matmul %205, %11, %cst_53 {dimension_numbers = #tpu.dot_dimension_numbers<[1], [0], [0], [1], [0, 0, 1, 1], [], []>} : vector<8x128xf32>, vector<128x384xf32>, vector<8x384xf32> -> vector<8x384xf32>
    %213 = vector.extract_strided_slice %211 {offsets = [0, 0], sizes = [8, 128], strides = [1, 1]} : vector<8x384xf32> to vector<8x128xf32>
    %214 = vector.extract_strided_slice %212 {offsets = [0, 0], sizes = [8, 128], strides = [1, 1]} : vector<8x384xf32> to vector<8x128xf32>
    %215 = arith.addf %213, %214 : vector<8x128xf32>
    %216 = arith.negf %215 : vector<8x128xf32>
    %217 = math.exp %216 : vector<8x128xf32>
    %cst_54 = arith.constant 1.000000e+00 : f32
    %218 = vector.broadcast %cst_54 : f32 to vector<8x128xf32>
    %219 = arith.addf %218, %217 : vector<8x128xf32>
    %220 = arith.divf %218, %219 : vector<8x128xf32>
    %221 = vector.extract_strided_slice %211 {offsets = [0, 128], sizes = [8, 128], strides = [1, 1]} : vector<8x384xf32> to vector<8x128xf32>
    %222 = vector.extract_strided_slice %212 {offsets = [0, 128], sizes = [8, 128], strides = [1, 1]} : vector<8x384xf32> to vector<8x128xf32>
    %223 = arith.addf %221, %222 : vector<8x128xf32>
    %224 = arith.negf %223 : vector<8x128xf32>
    %225 = math.exp %224 : vector<8x128xf32>
    %cst_55 = arith.constant 1.000000e+00 : f32
    %226 = vector.broadcast %cst_55 : f32 to vector<8x128xf32>
    %227 = arith.addf %226, %225 : vector<8x128xf32>
    %228 = arith.divf %226, %227 : vector<8x128xf32>
    %229 = vector.extract_strided_slice %211 {offsets = [0, 256], sizes = [8, 128], strides = [1, 1]} : vector<8x384xf32> to vector<8x128xf32>
    %230 = vector.extract_strided_slice %212 {offsets = [0, 256], sizes = [8, 128], strides = [1, 1]} : vector<8x384xf32> to vector<8x128xf32>
    %231 = arith.addf %230, %14 : vector<8x128xf32>
    %232 = arith.mulf %220, %231 : vector<8x128xf32>
    %233 = arith.addf %229, %232 : vector<8x128xf32>
    %234 = math.tanh %233 : vector<8x128xf32>
    %235 = arith.subf %205, %234 : vector<8x128xf32>
    %236 = arith.mulf %228, %235 : vector<8x128xf32>
    %237 = arith.addf %234, %236 : vector<8x128xf32>
    %238 = arith.index_cast %209 : i32 to index
    %c0_56 = arith.constant 0 : index
    %239 = vector.load %arg12[%238, %c0_56] : memref<64x128xf32, #tpu.memory_space<vmem>>, vector<8x128xf32>
    tpu.vector_store %arg12[%238, %c0_56], %237 {strides = array<i32>} : memref<64x128xf32, #tpu.memory_space<vmem>>, vector<8x128xf32>,
    %c7_i32 = arith.constant 7 : i32
    %c8_i32_57 = arith.constant 8 : i32
    %240 = arith.muli %c7_i32, %c8_i32_57 : i32
    %241 = tpu.assume_multiple %240, 8 : i32
    %242 = arith.index_cast %241 : i32 to index
    %c0_58 = arith.constant 0 : index
    %243 = vector.load %arg11[%242, %c0_58] : memref<64x384xf32, #tpu.memory_space<vmem>>, vector<8x384xf32>
    %cst_59 = arith.constant dense<0.000000e+00> : vector<8x384xf32>
    %244 = tpu.matmul %237, %11, %cst_59 {dimension_numbers = #tpu.dot_dimension_numbers<[1], [0], [0], [1], [0, 0, 1, 1], [], []>} : vector<8x128xf32>, vector<128x384xf32>, vector<8x384xf32> -> vector<8x384xf32>
    %245 = vector.extract_strided_slice %243 {offsets = [0, 0], sizes = [8, 128], strides = [1, 1]} : vector<8x384xf32> to vector<8x128xf32>
    %246 = vector.extract_strided_slice %244 {offsets = [0, 0], sizes = [8, 128], strides = [1, 1]} : vector<8x384xf32> to vector<8x128xf32>
    %247 = arith.addf %245, %246 : vector<8x128xf32>
    %248 = arith.negf %247 : vector<8x128xf32>
    %249 = math.exp %248 : vector<8x128xf32>
    %cst_60 = arith.constant 1.000000e+00 : f32
    %250 = vector.broadcast %cst_60 : f32 to vector<8x128xf32>
    %251 = arith.addf %250, %249 : vector<8x128xf32>
    %252 = arith.divf %250, %251 : vector<8x128xf32>
    %253 = vector.extract_strided_slice %243 {offsets = [0, 128], sizes = [8, 128], strides = [1, 1]} : vector<8x384xf32> to vector<8x128xf32>
    %254 = vector.extract_strided_slice %244 {offsets = [0, 128], sizes = [8, 128], strides = [1, 1]} : vector<8x384xf32> to vector<8x128xf32>
    %255 = arith.addf %253, %254 : vector<8x128xf32>
    %256 = arith.negf %255 : vector<8x128xf32>
    %257 = math.exp %256 : vector<8x128xf32>
    %cst_61 = arith.constant 1.000000e+00 : f32
    %258 = vector.broadcast %cst_61 : f32 to vector<8x128xf32>
    %259 = arith.addf %258, %257 : vector<8x128xf32>
    %260 = arith.divf %258, %259 : vector<8x128xf32>
    %261 = vector.extract_strided_slice %243 {offsets = [0, 256], sizes = [8, 128], strides = [1, 1]} : vector<8x384xf32> to vector<8x128xf32>
    %262 = vector.extract_strided_slice %244 {offsets = [0, 256], sizes = [8, 128], strides = [1, 1]} : vector<8x384xf32> to vector<8x128xf32>
    %263 = arith.addf %262, %14 : vector<8x128xf32>
    %264 = arith.mulf %252, %263 : vector<8x128xf32>
    %265 = arith.addf %261, %264 : vector<8x128xf32>
    %266 = math.tanh %265 : vector<8x128xf32>
    %267 = arith.subf %237, %266 : vector<8x128xf32>
    %268 = arith.mulf %260, %267 : vector<8x128xf32>
    %269 = arith.addf %266, %268 : vector<8x128xf32>
    %270 = arith.index_cast %241 : i32 to index
    %c0_62 = arith.constant 0 : index
    %271 = vector.load %arg12[%270, %c0_62] : memref<64x128xf32, #tpu.memory_space<vmem>>, vector<8x128xf32>
    tpu.vector_store %arg12[%270, %c0_62], %269 {strides = array<i32>} : memref<64x128xf32, #tpu.memory_space<vmem>>, vector<8x128xf32>,
    %c8_i32_63 = arith.constant 8 : i32
    %c0_64 = arith.constant 0 : index
    %c0_65 = arith.constant 0 : index
    %272 = vector.load %arg10[%c0_64, %c0_65] : memref<8x128xf32, #tpu.memory_space<vmem>>, vector<8x128xf32>
    tpu.vector_store %arg10[%c0_64, %c0_65], %269 {strides = array<i32>} : memref<8x128xf32, #tpu.memory_space<vmem>>, vector<8x128xf32>,
    %c0_66 = arith.constant 0 : index
    %c0_67 = arith.constant 0 : index
    %273 = vector.load %arg12[%c0_66, %c0_67] : memref<64x128xf32, #tpu.memory_space<vmem>>, vector<64x128xf32>
    %c0_68 = arith.constant 0 : index
    %c0_69 = arith.constant 0 : index
    %274 = vector.load %arg7[%c0_68, %c0_69] : memref<128x128xf32, #tpu.memory_space<vmem>>, vector<128x128xf32>
    %cst_70 = arith.constant dense<0.000000e+00> : vector<64x128xf32>
    %275 = tpu.matmul %273, %274, %cst_70 {dimension_numbers = #tpu.dot_dimension_numbers<[1], [0], [0], [1], [0, 0, 1, 1], [], []>} : vector<64x128xf32>, vector<128x128xf32>, vector<64x128xf32> -> vector<64x128xf32>
    %c0_71 = arith.constant 0 : index
    %c0_72 = arith.constant 0 : index
    %276 = vector.load %arg8[%c0_71, %c0_72] : memref<1x128xf32, #tpu.memory_space<vmem>>, vector<1x128xf32>
    %277 = vector.broadcast %276 : vector<1x128xf32> to vector<64x128xf32>
    %278 = arith.addf %275, %277 : vector<64x128xf32>
    %279 = math.tanh %278 : vector<64x128xf32>
    %c0_73 = arith.constant 0 : index
    %c0_74 = arith.constant 0 : index
    %c0_75 = arith.constant 0 : index
    %280 = vector.load %arg9[%c0_73, %c0_74, %c0_75] : memref<1x64x128xf32, #tpu.memory_space<vmem>>, vector<1x64x128xf32>
    %281 = vector.shape_cast %280 : vector<1x64x128xf32> to vector<64x128xf32>
    %282 = vector.shape_cast %279 : vector<64x128xf32> to vector<1x64x128xf32>
    tpu.vector_store %arg9[%c0_73, %c0_74, %c0_75], %282 {strides = array<i32>} : memref<1x64x128xf32, #tpu.memory_space<vmem>>, vector<1x64x128xf32>,
    return
  }
  func.func @transform_0(%arg0: i32, %arg1: i32) -> (i32, i32, i32) {
    %c0_i32 = arith.constant 0 : i32
    %c0_i32_0 = arith.constant 0 : i32
    return %arg0, %arg1, %c0_i32 : i32, i32, i32
  }
  func.func @transform_1(%arg0: i32, %arg1: i32) -> (i32, i32) {
    %c0_i32 = arith.constant 0 : i32
    %c0_i32_0 = arith.constant 0 : i32
    %c0_i32_1 = arith.constant 0 : i32
    return %c0_i32, %c0_i32_0 : i32, i32
  }
  func.func @transform_2(%arg0: i32, %arg1: i32) -> (i32, i32) {
    %c0_i32 = arith.constant 0 : i32
    %c0_i32_0 = arith.constant 0 : i32
    %c0_i32_1 = arith.constant 0 : i32
    return %c0_i32, %c0_i32_0 : i32, i32
  }
  func.func @transform_3(%arg0: i32, %arg1: i32) -> (i32, i32) {
    %c0_i32 = arith.constant 0 : i32
    %c0_i32_0 = arith.constant 0 : i32
    %c0_i32_1 = arith.constant 0 : i32
    return %c0_i32, %c0_i32_0 : i32, i32
  }
  func.func @transform_4(%arg0: i32, %arg1: i32) -> (i32, i32) {
    %c0_i32 = arith.constant 0 : i32
    %c0_i32_0 = arith.constant 0 : i32
    %c0_i32_1 = arith.constant 0 : i32
    return %c0_i32, %c0_i32_0 : i32, i32
  }
  func.func @transform_5(%arg0: i32, %arg1: i32) -> (i32, i32) {
    %c0_i32 = arith.constant 0 : i32
    %c0_i32_0 = arith.constant 0 : i32
    %c0_i32_1 = arith.constant 0 : i32
    return %c0_i32, %c0_i32_0 : i32, i32
  }
  func.func @transform_6(%arg0: i32, %arg1: i32) -> (i32, i32) {
    %c0_i32 = arith.constant 0 : i32
    %c0_i32_0 = arith.constant 0 : i32
    %c0_i32_1 = arith.constant 0 : i32
    return %c0_i32, %c0_i32_0 : i32, i32
  }
  func.func @transform_7(%arg0: i32, %arg1: i32) -> (i32, i32, i32) {
    %c0_i32 = arith.constant 0 : i32
    %c0_i32_0 = arith.constant 0 : i32
    return %arg0, %arg1, %c0_i32 : i32, i32, i32
  }
}

</mosaic_0001>

<llo_original>
// kernel: my_gru_forward.1
$region0: #{my_gru_forward.1}
  #allocation0 [shape = 'u32[]', space=smem, size = 0x4, offset = 0x4, fixed_abs, tag = 'smem constant byte address 0x4 - core index']
  #allocation1 [shape = 'u32[144,128]{1,0:T(1,128)}', space=vmem, size = 0x12000, scoped, tag = 'internal scratch']
  #allocation2 [shape = 'f32[8,128]{1,0:T(8,128)}', space=vmem, size = 0x1000, scoped, tag = 'scratch operand']
  #allocation3 [shape = 'f32[64,384]{1,0:T(8,128)}', space=vmem, size = 0x18000, scoped, tag = 'scratch operand']
  #allocation4 [shape = 'f32[64,128]{1,0:T(8,128)}', space=vmem, size = 0x8000, scoped, tag = 'scratch operand']
  %s0 = inlined_call_operand.vmem [shape: f32[1,64,4], index: 0, kind: input, shape index: {}]
  %s1 = inlined_call_operand.vmem [shape: f32[4,384], index: 1, kind: input, shape index: {}]
  %s2 = inlined_call_operand.vmem [shape: f32[1,384], index: 2, kind: input, shape index: {}]
  %s3 = inlined_call_operand.vmem [shape: f32[128,384], index: 3, kind: input, shape index: {}]
  %s4 = inlined_call_operand.vmem [shape: f32[1,128], index: 4, kind: input, shape index: {}]
  %s5 = inlined_call_operand.vmem [shape: f32[128,128], index: 5, kind: input, shape index: {}]
  %s6 = inlined_call_operand.vmem [shape: f32[1,128], index: 6, kind: input, shape index: {}]
  %s7 = inlined_call_operand.vmem [shape: f32[1,64,128], index: 7, kind: output, shape index: {}]
  %s8 = sld [smem:[#allocation0]]
  $region42: #{my_gru_forward.1} parent=0
    _
  %s10 = ssub.s32 1, %s8
  %s11 = scalar_select 0, %s10, %s8
  // Predicated region
  $region2: #{my_gru_forward.1} parent=0 // pred_check
    _
  $region3: #{my_gru_forward.1} parent=0 // pred_check_branch
    %13 = sbr.rel (0) target = $region5
  $region4: #{my_gru_forward.1} parent=0 // pred_region
    _
  $region5: #{my_gru_forward.1} parent=0 // pred_fallthru
    _
  // Predicated region
  $region6: #{my_gru_forward.1} parent=0 // pred_check
    _
  $region7: #{my_gru_forward.1} parent=0 // pred_check_branch
    %15 = sbr.rel (0) target = $region9
  $region8: #{my_gru_forward.1} parent=0 // pred_region
    _
  $region9: #{my_gru_forward.1} parent=0 // pred_fallthru
    _
  // Predicated region
  $region10: #{my_gru_forward.1} parent=0 // pred_check
    _
  $region11: #{my_gru_forward.1} parent=0 // pred_check_branch
    %17 = sbr.rel (0) target = $region13
  $region12: #{my_gru_forward.1} parent=0 // pred_region
    _
  $region13: #{my_gru_forward.1} parent=0 // pred_fallthru
    _
  // Predicated region
  $region14: #{my_gru_forward.1} parent=0 // pred_check
    _
  $region15: #{my_gru_forward.1} parent=0 // pred_check_branch
    %19 = sbr.rel (0) target = $region17
  $region16: #{my_gru_forward.1} parent=0 // pred_region
    _
  $region17: #{my_gru_forward.1} parent=0 // pred_fallthru
    _
  // Predicated region
  $region18: #{my_gru_forward.1} parent=0 // pred_check
    _
  $region19: #{my_gru_forward.1} parent=0 // pred_check_branch
    %21 = sbr.rel (0) target = $region21
  $region20: #{my_gru_forward.1} parent=0 // pred_region
    _
  $region21: #{my_gru_forward.1} parent=0 // pred_fallthru
    _
  // Predicated region
  $region22: #{my_gru_forward.1} parent=0 // pred_check
    _
  $region23: #{my_gru_forward.1} parent=0 // pred_check_branch
    %23 = sbr.rel (0) target = $region25
  $region24: #{my_gru_forward.1} parent=0 // pred_region
    _
  $region25: #{my_gru_forward.1} parent=0 // pred_fallthru
    _
  // Predicated region
  $region26: #{my_gru_forward.1} parent=0 // pred_check
    _
  $region27: #{my_gru_forward.1} parent=0 // pred_check_branch
    %25 = sbr.rel (0) target = $region29
  $region28: #{my_gru_forward.1} parent=0 // pred_region
    _
  $region29: #{my_gru_forward.1} parent=0 // pred_fallthru
    _
  %p26 = scmp.eq.s32.totalorder 0, 0
  // Predicated region
  $region30: #{my_gru_forward.1} parent=0 // pred_check
    %p27 = pneg %p26
  $region31: #{my_gru_forward.1} parent=0 // pred_check_branch
    %29 = sbr.rel (%p27) target = $region33
  $region32: #{my_gru_forward.1} parent=0 // pred_region
    %30 = vst [vmem:[#allocation2] sm:$0xff] 0.0
  $region33: #{my_gru_forward.1} parent=0 // pred_fallthru
    _
  %v31 = vld [vmem:[%s0] sm:$0xff]
  %v32 = vld [vmem:[%s0 + $0x8] sm:$0xff]
  %v33 = vld [vmem:[%s0 + $0x10] sm:$0xff]
  %v34 = vld [vmem:[%s0 + $0x18] sm:$0xff]
  %v35 = vld [vmem:[%s0 + $0x20] sm:$0xff]
  %v36 = vld [vmem:[%s0 + $0x28] sm:$0xff]
  %v37 = vld [vmem:[%s0 + $0x30] sm:$0xff]
  %v38 = vld [vmem:[%s0 + $0x38] sm:$0xff]
  %v39 = vld [vmem:[%s1] sm:$0xff]
  %v40 = vld [vmem:[%s1 + $0x8] sm:$0xf]
  %v41 = vld [vmem:[%s2] sm:$0x7]
  %v43 = vlaneseq
  %v44 = vshrl.u32 %v43, 7
  %v45 = vsub.s32 0, %v44
  %v46 = vrot.slane %v41, %v45
  %v47 = vlaneseq
  %v48 = vshrl.u32 %v47, 7
  %v49 = vsub.s32 1, %v48
  %v50 = vrot.slane %v41, %v49
  %v51 = vlaneseq
  %v52 = vshrl.u32 %v51, 7
  %v53 = vsub.s32 2, %v52
  %v54 = vrot.slane %v41, %v53
  %v60 = vcombine.high %v39, %v39
  %vm61 = vcmask 31744
  %v63 = vsel %vm61, %v31, 0
  %v66 = vsel %vm61, %v32, 0
  %v69 = vsel %vm61, %v33, 0
  %v72 = vsel %vm61, %v34, 0
  %v75 = vsel %vm61, %v35, 0
  %v78 = vsel %vm61, %v36, 0
  %v81 = vsel %vm61, %v37, 0
  %v84 = vsel %vm61, %v38, 0
  %vm86 = vcmask 1043456
  %v87 = vsel %vm86, %v39, 0
  %v89 = vsel %vm86, %v60, 0
  %v91 = vsel %vm86, %v40, 0
  %93 = vmatprep.subr.mxu0 0.0
  %94 = vmatpush1.msra.mxu0 0.0
  %95 = vmatprep.subr.mxu0 0.0
  %96 = vmatpush1.msra.mxu0 0.0
  %97 = vmatprep.subr.mxu0 0.0
  %98 = vmatpush1.msra.mxu0 0.0
  %99 = vmatprep.subr.mxu0 0.0
  %100 = vmatpush1.msra.mxu0 0.0
  %101 = vmatprep.subr.mxu0 0.0
  %102 = vmatpush1.msra.mxu0 0.0
  %103 = vmatprep.subr.mxu0 0.0
  %104 = vmatpush1.msra.mxu0 0.0
  %105 = vmatprep.subr.mxu0 0.0
  %106 = vmatpush1.msra.mxu0 0.0
  %107 = vmatprep.subr.mxu0 0.0
  %108 = vmatpush1.msra.mxu0 0.0
  %109 = vmatprep.subr.mxu0 0.0
  %110 = vmatpush1.msra.mxu0 0.0
  %111 = vmatprep.subr.mxu0 0.0
  %112 = vmatpush1.msra.mxu0 0.0
  %113 = vmatprep.subr.mxu0 0.0
  %114 = vmatpush1.msra.mxu0 0.0
  %115 = vmatprep.subr.mxu0 0.0
  %116 = vmatpush1.msra.mxu0 0.0
  %117 = vmatprep.subr.mxu0 0.0
  %118 = vmatpush1.msra.mxu0 0.0
  %119 = vmatprep.subr.mxu0 0.0
  %120 = vmatpush1.msra.mxu0 0.0
  %121 = vmatprep.subr.mxu0 0.0
  %122 = vmatpush1.msra.mxu0 0.0
  %123 = vmatprep.subr.mxu0 %v89
  %124 = vmatpush1.msra.mxu0 %v87
  %125 = vmatprep.subr.mxu0 0.0
  %126 = vmatpush2.msra.mxu0 0.0
  %127 = vmatprep.subr.mxu0 0.0
  %128 = vmatpush2.msra.mxu0 0.0
  %129 = vmatprep.subr.mxu0 0.0
  %130 = vmatpush2.msra.mxu0 0.0
  %131 = vmatprep.subr.mxu0 0.0
  %132 = vmatpush2.msra.mxu0 0.0
  %133 = vmatprep.subr.mxu0 0.0
  %134 = vmatpush2.msra.mxu0 0.0
  %135 = vmatprep.subr.mxu0 0.0
  %136 = vmatpush2.msra.mxu0 0.0
  %137 = vmatprep.subr.mxu0 0.0
  %138 = vmatpush2.msra.mxu0 0.0
  %139 = vmatprep.subr.mxu0 0.0
  %140 = vmatpush2.msra.mxu0 0.0
  %141 = vmatprep.subr.mxu0 0.0
  %142 = vmatpush2.msra.mxu0 0.0
  %143 = vmatprep.subr.mxu0 0.0
  %144 = vmatpush2.msra.mxu0 0.0
  %145 = vmatprep.subr.mxu0 0.0
  %146 = vmatpush2.msra.mxu0 0.0
  %147 = vmatprep.subr.mxu0 0.0
  %148 = vmatpush2.msra.mxu0 0.0
  %149 = vmatprep.subr.mxu0 0.0
  %150 = vmatpush2.msra.mxu0 0.0
  %151 = vmatprep.subr.mxu0 0.0
  %152 = vmatpush2.msra.mxu0 0.0
  %153 = vmatprep.subr.mxu0 0.0
  %154 = vmatpush2.msra.mxu0 0.0
  %155 = vmatprep.subr.mxu0 0.0
  %156 = vmatpush2.msra.mxu0 0.0
  %157 = vmatprep.mubr.f32.mxu0 0.0
  %158 = vmatmul.mubr.f32.gmra.mxu0 %v63
  %v159 = vpop.f32.mrf.mxu0
  %v160 = vadd.f32 %v46, %v159
  %v161 = vpop.f32.mrf.mxu0
  %v162 = vadd.f32 %v50, %v161
  %163 = vmatprep.mubr.f32.mxu0 0.0
  %164 = vmatmul.mubr.f32.gmra.mxu0 %v66
  %v165 = vpop.f32.mrf.mxu0
  %v166 = vadd.f32 %v46, %v165
  %v167 = vpop.f32.mrf.mxu0
  %v168 = vadd.f32 %v50, %v167
  %169 = vmatprep.mubr.f32.mxu0 0.0
  %170 = vmatmul.mubr.f32.gmra.mxu0 %v69
  %v171 = vpop.f32.mrf.mxu0
  %v172 = vadd.f32 %v46, %v171
  %v173 = vpop.f32.mrf.mxu0
  %v174 = vadd.f32 %v50, %v173
  %175 = vmatprep.mubr.f32.mxu0 0.0
  %176 = vmatmul.mubr.f32.gmra.mxu0 %v72
  %v177 = vpop.f32.mrf.mxu0
  %v178 = vadd.f32 %v46, %v177
  %v179 = vpop.f32.mrf.mxu0
  %v180 = vadd.f32 %v50, %v179
  %181 = vmatprep.mubr.f32.mxu0 0.0
  %182 = vmatmul.mubr.f32.gmra.mxu0 %v75
  %v183 = vpop.f32.mrf.mxu0
  %v184 = vadd.f32 %v46, %v183
  %v185 = vpop.f32.mrf.mxu0
  %v186 = vadd.f32 %v50, %v185
  %187 = vmatprep.mubr.f32.mxu0 0.0
  %188 = vmatmul.mubr.f32.gmra.mxu0 %v78
  %v189 = vpop.f32.mrf.mxu0
  %v190 = vadd.f32 %v46, %v189
  %v191 = vpop.f32.mrf.mxu0
  %v192 = vadd.f32 %v50, %v191
  %193 = vmatprep.mubr.f32.mxu0 0.0
  %194 = vmatmul.mubr.f32.gmra.mxu0 %v81
  %v195 = vpop.f32.mrf.mxu0
  %v196 = vadd.f32 %v46, %v195
  %v197 = vpop.f32.mrf.mxu0
  %v198 = vadd.f32 %v50, %v197
  %199 = vmatprep.mubr.f32.mxu0 0.0
  %200 = vmatmul.mubr.f32.gmra.mxu0 %v84
  %v201 = vpop.f32.mrf.mxu0
  %v202 = vadd.f32 %v46, %v201
  %v203 = vpop.f32.mrf.mxu0
  %v204 = vadd.f32 %v50, %v203
  %205 = vdwg.mxu0
  %206 = vmatprep.subr.mxu0 0.0
  %207 = vmatpush1.msra.mxu0 0.0
  %208 = vmatprep.subr.mxu0 0.0
  %209 = vmatpush1.msra.mxu0 0.0
  %210 = vmatprep.subr.mxu0 0.0
  %211 = vmatpush1.msra.mxu0 0.0
  %212 = vmatprep.subr.mxu0 0.0
  %213 = vmatpush1.msra.mxu0 0.0
  %214 = vmatprep.subr.mxu0 0.0
  %215 = vmatpush1.msra.mxu0 0.0
  %216 = vmatprep.subr.mxu0 0.0
  %217 = vmatpush1.msra.mxu0 0.0
  %218 = vmatprep.subr.mxu0 0.0
  %219 = vmatpush1.msra.mxu0 0.0
  %220 = vmatprep.subr.mxu0 0.0
  %221 = vmatpush1.msra.mxu0 0.0
  %222 = vmatprep.subr.mxu0 0.0
  %223 = vmatpush1.msra.mxu0 0.0
  %224 = vmatprep.subr.mxu0 0.0
  %225 = vmatpush1.msra.mxu0 0.0
  %226 = vmatprep.subr.mxu0 0.0
  %227 = vmatpush1.msra.mxu0 0.0
  %228 = vmatprep.subr.mxu0 0.0
  %229 = vmatpush1.msra.mxu0 0.0
  %230 = vmatprep.subr.mxu0 0.0
  %231 = vmatpush1.msra.mxu0 0.0
  %232 = vmatprep.subr.mxu0 0.0
  %233 = vmatpush1.msra.mxu0 0.0
  %234 = vmatprep.subr.mxu0 0.0
  %235 = vmatpush1.msra.mxu0 0.0
  %236 = vmatprep.subr.mxu0 0.0
  %237 = vmatpush1.msra.mxu0 %v91
  %238 = vmatprep.subr.mxu0 0.0
  %239 = vmatpush2.msra.mxu0 0.0
  %240 = vmatprep.subr.mxu0 0.0
  %241 = vmatpush2.msra.mxu0 0.0
  %242 = vmatprep.subr.mxu0 0.0
  %243 = vmatpush2.msra.mxu0 0.0
  %244 = vmatprep.subr.mxu0 0.0
  %245 = vmatpush2.msra.mxu0 0.0
  %246 = vmatprep.subr.mxu0 0.0
  %247 = vmatpush2.msra.mxu0 0.0
  %248 = vmatprep.subr.mxu0 0.0
  %249 = vmatpush2.msra.mxu0 0.0
  %250 = vmatprep.subr.mxu0 0.0
  %251 = vmatpush2.msra.mxu0 0.0
  %252 = vmatprep.subr.mxu0 0.0
  %253 = vmatpush2.msra.mxu0 0.0
  %254 = vmatprep.subr.mxu0 0.0
  %255 = vmatpush2.msra.mxu0 0.0
  %256 = vmatprep.subr.mxu0 0.0
  %257 = vmatpush2.msra.mxu0 0.0
  %258 = vmatprep.subr.mxu0 0.0
  %259 = vmatpush2.msra.mxu0 0.0
  %260 = vmatprep.subr.mxu0 0.0
  %261 = vmatpush2.msra.mxu0 0.0
  %262 = vmatprep.subr.mxu0 0.0
  %263 = vmatpush2.msra.mxu0 0.0
  %264 = vmatprep.subr.mxu0 0.0
  %265 = vmatpush2.msra.mxu0 0.0
  %266 = vmatprep.subr.mxu0 0.0
  %267 = vmatpush2.msra.mxu0 0.0
  %268 = vmatprep.subr.mxu0 0.0
  %269 = vmatpush2.msra.mxu0 0.0
  %270 = vmatprep.mubr.f32.mxu0 0.0
  %271 = vmatmul.mubr.f32.gmra.mxu0 %v63
  %v272 = vpop.f32.mrf.mxu0
  %v273 = vadd.f32 %v54, %v272
  %v274 = vpop.f32.mrf.mxu0
  %275 = vmatprep.mubr.f32.mxu0 0.0
  %276 = vmatmul.mubr.f32.gmra.mxu0 %v66
  %v277 = vpop.f32.mrf.mxu0
  %v278 = vadd.f32 %v54, %v277
  %v279 = vpop.f32.mrf.mxu0
  %280 = vmatprep.mubr.f32.mxu0 0.0
  %281 = vmatmul.mubr.f32.gmra.mxu0 %v69
  %v282 = vpop.f32.mrf.mxu0
  %v283 = vadd.f32 %v54, %v282
  %v284 = vpop.f32.mrf.mxu0
  %285 = vmatprep.mubr.f32.mxu0 0.0
  %286 = vmatmul.mubr.f32.gmra.mxu0 %v72
  %v287 = vpop.f32.mrf.mxu0
  %v288 = vadd.f32 %v54, %v287
  %v289 = vpop.f32.mrf.mxu0
  %290 = vmatprep.mubr.f32.mxu0 0.0
  %291 = vmatmul.mubr.f32.gmra.mxu0 %v75
  %v292 = vpop.f32.mrf.mxu0
  %v293 = vadd.f32 %v54, %v292
  %v294 = vpop.f32.mrf.mxu0
  %295 = vmatprep.mubr.f32.mxu0 0.0
  %296 = vmatmul.mubr.f32.gmra.mxu0 %v78
  %v297 = vpop.f32.mrf.mxu0
  %v298 = vadd.f32 %v54, %v297
  %v299 = vpop.f32.mrf.mxu0
  %300 = vmatprep.mubr.f32.mxu0 0.0
  %301 = vmatmul.mubr.f32.gmra.mxu0 %v81
  %v302 = vpop.f32.mrf.mxu0
  %v303 = vadd.f32 %v54, %v302
  %v304 = vpop.f32.mrf.mxu0
  %305 = vmatprep.mubr.f32.mxu0 0.0
  %306 = vmatmul.mubr.f32.gmra.mxu0 %v84
  %v307 = vpop.f32.mrf.mxu0
  %v308 = vadd.f32 %v54, %v307
  %v309 = vpop.f32.mrf.mxu0
  %310 = vdwg.mxu0
  %311 = vst [vmem:[#allocation3] sm:$0xff] %v160
  %312 = vst [vmem:[#allocation3 + $0x8] sm:$0xff] %v162
  %313 = vst [vmem:[#allocation3 + $0x10] sm:$0xff] %v273
  %314 = vst [vmem:[#allocation3 + $0x18] sm:$0xff] %v166
  %315 = vst [vmem:[#allocation3 + $0x20] sm:$0xff] %v168
  %316 = vst [vmem:[#allocation3 + $0x28] sm:$0xff] %v278
  %317 = vst [vmem:[#allocation3 + $0x30] sm:$0xff] %v172
  %318 = vst [vmem:[#allocation3 + $0x38] sm:$0xff] %v174
  %319 = vst [vmem:[#allocation3 + $0x40] sm:$0xff] %v283
  %320 = vst [vmem:[#allocation3 + $0x48] sm:$0xff] %v178
  %321 = vst [vmem:[#allocation3 + $0x50] sm:$0xff] %v180
  %322 = vst [vmem:[#allocation3 + $0x58] sm:$0xff] %v288
  %323 = vst [vmem:[#allocation3 + $0x60] sm:$0xff] %v184
  %324 = vst [vmem:[#allocation3 + $0x68] sm:$0xff] %v186
  %325 = vst [vmem:[#allocation3 + $0x70] sm:$0xff] %v293
  %326 = vst [vmem:[#allocation3 + $0x78] sm:$0xff] %v190
  %327 = vst [vmem:[#allocation3 + $0x80] sm:$0xff] %v192
  %328 = vst [vmem:[#allocation3 + $0x88] sm:$0xff] %v298
  %329 = vst [vmem:[#allocation3 + $0x90] sm:$0xff] %v196
  %330 = vst [vmem:[#allocation3 + $0x98] sm:$0xff] %v198
  %331 = vst [vmem:[#allocation3 + $0xa0] sm:$0xff] %v303
  %332 = vst [vmem:[#allocation3 + $0xa8] sm:$0xff] %v202
  %333 = vst [vmem:[#allocation3 + $0xb0] sm:$0xff] %v204
  %334 = vst [vmem:[#allocation3 + $0xb8] sm:$0xff] %v308
  %v335 = vld [vmem:[%s3] sm:$0xff]
  %v336 = vld [vmem:[%s3 + $0x8] sm:$0xff]
  %v337 = vld [vmem:[%s3 + $0x10] sm:$0xff]
  %v338 = vld [vmem:[%s3 + $0x18] sm:$0xff]
  %v339 = vld [vmem:[%s3 + $0x20] sm:$0xff]
  %v340 = vld [vmem:[%s3 + $0x28] sm:$0xff]
  %v341 = vld [vmem:[%s3 + $0x30] sm:$0xff]
  %v342 = vld [vmem:[%s3 + $0x38] sm:$0xff]
  %v343 = vld [vmem:[%s3 + $0x40] sm:$0xff]
  %v344 = vld [vmem:[%s3 + $0x48] sm:$0xff]
  %v345 = vld [vmem:[%s3 + $0x50] sm:$0xff]
  %v346 = vld [vmem:[%s3 + $0x58] sm:$0xff]
  %v347 = vld [vmem:[%s3 + $0x60] sm:$0xff]
  %v348 = vld [vmem:[%s3 + $0x68] sm:$0xff]
  %v349 = vld [vmem:[%s3 + $0x70] sm:$0xff]
  %v350 = vld [vmem:[%s3 + $0x78] sm:$0xff]
  %v351 = vld [vmem:[%s3 + $0x80] sm:$0xff]
  %v352 = vld [vmem:[%s3 + $0x88] sm:$0xff]
  %v353 = vld [vmem:[%s3 + $0x90] sm:$0xff]
  %v354 = vld [vmem:[%s3 + $0x98] sm:$0xff]
  %v355 = vld [vmem:[%s3 + $0xa0] sm:$0xff]
  %v356 = vld [vmem:[%s3 + $0xa8] sm:$0xff]
  %v357 = vld [vmem:[%s3 + $0xb0] sm:$0xff]
  %v358 = vld [vmem:[%s3 + $0xb8] sm:$0xff]
  %v359 = vld [vmem:[%s3 + $0xc0] sm:$0xff]
  %v360 = vld [vmem:[%s3 + $0xc8] sm:$0xff]
  %v361 = vld [vmem:[%s3 + $0xd0] sm:$0xff]
  %v362 = vld [vmem:[%s3 + $0xd8] sm:$0xff]
  %v363 = vld [vmem:[%s3 + $0xe0] sm:$0xff]
  %v364 = vld [vmem:[%s3 + $0xe8] sm:$0xff]
  %v365 = vld [vmem:[%s3 + $0xf0] sm:$0xff]
  %v366 = vld [vmem:[%s3 + $0xf8] sm:$0xff]
  %v367 = vld [vmem:[%s3 + $0x100] sm:$0xff]
  %v368 = vld [vmem:[%s3 + $0x108] sm:$0xff]
  %v369 = vld [vmem:[%s3 + $0x110] sm:$0xff]
  %v370 = vld [vmem:[%s3 + $0x118] sm:$0xff]
  %v371 = vld [vmem:[%s3 + $0x120] sm:$0xff]
  %v372 = vld [vmem:[%s3 + $0x128] sm:$0xff]
  %v373 = vld [vmem:[%s3 + $0x130] sm:$0xff]
  %v374 = vld [vmem:[%s3 + $0x138] sm:$0xff]
  %v375 = vld [vmem:[%s3 + $0x140] sm:$0xff]
  %v376 = vld [vmem:[%s3 + $0x148] sm:$0xff]
  %v377 = vld [vmem:[%s3 + $0x150] sm:$0xff]
  %v378 = vld [vmem:[%s3 + $0x158] sm:$0xff]
  %v379 = vld [vmem:[%s3 + $0x160] sm:$0xff]
  %v380 = vld [vmem:[%s3 + $0x168] sm:$0xff]
  %v381 = vld [vmem:[%s3 + $0x170] sm:$0xff]
  %v382 = vld [vmem:[%s3 + $0x178] sm:$0xff]
  %v383 = vld [vmem:[%s4] sm:$0x1]
  %v385 = vlaneseq
  %v386 = vshrl.u32 %v385, 7
  %v387 = vsub.s32 0, %v386
  %v388 = vrot.slane %v383, %v387
  %v390 = vld [vmem:[#allocation2] sm:$0xff]
  %s391 = smul.u32 0, 3
  %s392 = smul.addr %s391, 8
  %s393 = scalar_lea.vmem [#allocation3], %s392
  %v394 = vld [vmem:[%s393] sm:$0xff]
  %v395 = vld [vmem:[%s393 + $0x8] sm:$0xff]
  %v396 = vld [vmem:[%s393 + $0x10] sm:$0xff]
  %397 = vmatprep.subr.mxu0 %v381
  %398 = vmatpush1.msra.mxu0 %v380
  %399 = vmatprep.subr.mxu0 %v378
  %400 = vmatpush1.msra.mxu0 %v377
  %401 = vmatprep.subr.mxu0 %v375
  %402 = vmatpush1.msra.mxu0 %v374
  %403 = vmatprep.subr.mxu0 %v372
  %404 = vmatpush1.msra.mxu0 %v371
  %405 = vmatprep.subr.mxu0 %v369
  %406 = vmatpush1.msra.mxu0 %v368
  %407 = vmatprep.subr.mxu0 %v366
  %408 = vmatpush1.msra.mxu0 %v365
  %409 = vmatprep.subr.mxu0 %v363
  %410 = vmatpush1.msra.mxu0 %v362
  %411 = vmatprep.subr.mxu0 %v360
  %412 = vmatpush1.msra.mxu0 %v359
  %413 = vmatprep.subr.mxu0 %v357
  %414 = vmatpush1.msra.mxu0 %v356
  %415 = vmatprep.subr.mxu0 %v354
  %416 = vmatpush1.msra.mxu0 %v353
  %417 = vmatprep.subr.mxu0 %v351
  %418 = vmatpush1.msra.mxu0 %v350
  %419 = vmatprep.subr.mxu0 %v348
  %420 = vmatpush1.msra.mxu0 %v347
  %421 = vmatprep.subr.mxu0 %v345
  %422 = vmatpush1.msra.mxu0 %v344
  %423 = vmatprep.subr.mxu0 %v342
  %424 = vmatpush1.msra.mxu0 %v341
  %425 = vmatprep.subr.mxu0 %v339
  %426 = vmatpush1.msra.mxu0 %v338
  %427 = vmatprep.subr.mxu0 %v336
  %428 = vmatpush1.msra.mxu0 %v335
  %429 = vmatprep.subr.mxu0 0.0
  %430 = vmatpush2.msra.mxu0 0.0
  %431 = vmatprep.subr.mxu0 0.0
  %432 = vmatpush2.msra.mxu0 0.0
  %433 = vmatprep.subr.mxu0 0.0
  %434 = vmatpush2.msra.mxu0 0.0
  %435 = vmatprep.subr.mxu0 0.0
  %436 = vmatpush2.msra.mxu0 0.0
  %437 = vmatprep.subr.mxu0 0.0
  %438 = vmatpush2.msra.mxu0 0.0
  %439 = vmatprep.subr.mxu0 0.0
  %440 = vmatpush2.msra.mxu0 0.0
  %441 = vmatprep.subr.mxu0 0.0
  %442 = vmatpush2.msra.mxu0 0.0
  %443 = vmatprep.subr.mxu0 0.0
  %444 = vmatpush2.msra.mxu0 0.0
  %445 = vmatprep.subr.mxu0 0.0
  %446 = vmatpush2.msra.mxu0 0.0
  %447 = vmatprep.subr.mxu0 0.0
  %448 = vmatpush2.msra.mxu0 0.0
  %449 = vmatprep.subr.mxu0 0.0
  %450 = vmatpush2.msra.mxu0 0.0
  %451 = vmatprep.subr.mxu0 0.0
  %452 = vmatpush2.msra.mxu0 0.0
  %453 = vmatprep.subr.mxu0 0.0
  %454 = vmatpush2.msra.mxu0 0.0
  %455 = vmatprep.subr.mxu0 0.0
  %456 = vmatpush2.msra.mxu0 0.0
  %457 = vmatprep.subr.mxu0 0.0
  %458 = vmatpush2.msra.mxu0 0.0
  %459 = vmatprep.subr.mxu0 0.0
  %460 = vmatpush2.msra.mxu0 0.0
  %461 = vmatprep.mubr.f32.mxu0 0.0
  %462 = vmatmul.mubr.f32.gmra.mxu0 %v390
  %v463 = vpop.f32.mrf.mxu0
  %v464 = vadd.f32 0.0, %v463
  %v465 = vpop.f32.mrf.mxu0
  %v466 = vadd.f32 0.0, %v465
  %467 = vdwg.mxu0
  %468 = vmatprep.subr.mxu0 0.0
  %469 = vmatpush1.msra.mxu0 %v382
  %470 = vmatprep.subr.mxu0 0.0
  %471 = vmatpush1.msra.mxu0 %v379
  %472 = vmatprep.subr.mxu0 0.0
  %473 = vmatpush1.msra.mxu0 %v376
  %474 = vmatprep.subr.mxu0 0.0
  %475 = vmatpush1.msra.mxu0 %v373
  %476 = vmatprep.subr.mxu0 0.0
  %477 = vmatpush1.msra.mxu0 %v370
  %478 = vmatprep.subr.mxu0 0.0
  %479 = vmatpush1.msra.mxu0 %v367
  %480 = vmatprep.subr.mxu0 0.0
  %481 = vmatpush1.msra.mxu0 %v364
  %482 = vmatprep.subr.mxu0 0.0
  %483 = vmatpush1.msra.mxu0 %v361
  %484 = vmatprep.subr.mxu0 0.0
  %485 = vmatpush1.msra.mxu0 %v358
  %486 = vmatprep.subr.mxu0 0.0
  %487 = vmatpush1.msra.mxu0 %v355
  %488 = vmatprep.subr.mxu0 0.0
  %489 = vmatpush1.msra.mxu0 %v352
  %490 = vmatprep.subr.mxu0 0.0
  %491 = vmatpush1.msra.mxu0 %v349
  %492 = vmatprep.subr.mxu0 0.0
  %493 = vmatpush1.msra.mxu0 %v346
  %494 = vmatprep.subr.mxu0 0.0
  %495 = vmatpush1.msra.mxu0 %v343
  %496 = vmatprep.subr.mxu0 0.0
  %497 = vmatpush1.msra.mxu0 %v340
  %498 = vmatprep.subr.mxu0 0.0
  %499 = vmatpush1.msra.mxu0 %v337
  %500 = vmatprep.subr.mxu0 0.0
  %501 = vmatpush2.msra.mxu0 0.0
  %502 = vmatprep.subr.mxu0 0.0
  %503 = vmatpush2.msra.mxu0 0.0
  %504 = vmatprep.subr.mxu0 0.0
  %505 = vmatpush2.msra.mxu0 0.0
  %506 = vmatprep.subr.mxu0 0.0
  %507 = vmatpush2.msra.mxu0 0.0
  %508 = vmatprep.subr.mxu0 0.0
  %509 = vmatpush2.msra.mxu0 0.0
  %510 = vmatprep.subr.mxu0 0.0
  %511 = vmatpush2.msra.mxu0 0.0
  %512 = vmatprep.subr.mxu0 0.0
  %513 = vmatpush2.msra.mxu0 0.0
  %514 = vmatprep.subr.mxu0 0.0
  %515 = vmatpush2.msra.mxu0 0.0
  %516 = vmatprep.subr.mxu0 0.0
  %517 = vmatpush2.msra.mxu0 0.0
  %518 = vmatprep.subr.mxu0 0.0
  %519 = vmatpush2.msra.mxu0 0.0
  %520 = vmatprep.subr.mxu0 0.0
  %521 = vmatpush2.msra.mxu0 0.0
  %522 = vmatprep.subr.mxu0 0.0
  %523 = vmatpush2.msra.mxu0 0.0
  %524 = vmatprep.subr.mxu0 0.0
  %525 = vmatpush2.msra.mxu0 0.0
  %526 = vmatprep.subr.mxu0 0.0
  %527 = vmatpush2.msra.mxu0 0.0
  %528 = vmatprep.subr.mxu0 0.0
  %529 = vmatpush2.msra.mxu0 0.0
  %530 = vmatprep.subr.mxu0 0.0
  %531 = vmatpush2.msra.mxu0 0.0
  %532 = vmatprep.mubr.f32.mxu0 0.0
  %533 = vmatmul.mubr.f32.gmra.mxu0 %v390
  %v534 = vpop.f32.mrf.mxu0
  %v535 = vadd.f32 0.0, %v534
  %v536 = vpop.f32.mrf.mxu0
  %537 = vdwg.mxu0
  %v538 = vadd.f32 %v394, %v464
  %v539 = vxor.u32 %v538, 2147483648
  %v540 = vmul.f32 %v539, 1.442695
  %v541 = vpow.pop %v540
  %v542 = vadd.f32 %v541, 1.0
  %v543 = vrcp.pop %v542
  %v544 = vmul.f32 1.0, %v543
  %v545 = vadd.f32 %v395, %v466
  %v546 = vxor.u32 %v545, 2147483648
  %v547 = vmul.f32 %v546, 1.442695
  %v548 = vpow.pop %v547
  %v549 = vadd.f32 %v548, 1.0
  %v550 = vrcp.pop %v549
  %v551 = vmul.f32 1.0, %v550
  %v552 = vadd.f32 %v535, %v388
  %v553 = vmul.f32 %v544, %v552
  %v554 = vadd.f32 %v396, %v553
  %v555 = vtanh.pop %v554
  %v556 = vsub.f32 %v390, %v555
  %v557 = vmul.f32 %v551, %v556
  %v558 = vadd.f32 %v555, %v557
  %559 = vst [vmem:[#allocation4] sm:$0xff] %v558
  %s560 = smul.u32 1, 3
  %s561 = smul.addr %s560, 8
  %s562 = scalar_lea.vmem [#allocation3], %s561
  %v563 = vld [vmem:[%s562] sm:$0xff]
  %v564 = vld [vmem:[%s562 + $0x8] sm:$0xff]
  %v565 = vld [vmem:[%s562 + $0x10] sm:$0xff]
  %566 = vmatprep.subr.mxu0 %v381
  %567 = vmatpush1.msra.mxu0 %v380
  %568 = vmatprep.subr.mxu0 %v378
  %569 = vmatpush1.msra.mxu0 %v377
  %570 = vmatprep.subr.mxu0 %v375
  %571 = vmatpush1.msra.mxu0 %v374
  %572 = vmatprep.subr.mxu0 %v372
  %573 = vmatpush1.msra.mxu0 %v371
  %574 = vmatprep.subr.mxu0 %v369
  %575 = vmatpush1.msra.mxu0 %v368
  %576 = vmatprep.subr.mxu0 %v366
  %577 = vmatpush1.msra.mxu0 %v365
  %578 = vmatprep.subr.mxu0 %v363
  %579 = vmatpush1.msra.mxu0 %v362
  %580 = vmatprep.subr.mxu0 %v360
  %581 = vmatpush1.msra.mxu0 %v359
  %582 = vmatprep.subr.mxu0 %v357
  %583 = vmatpush1.msra.mxu0 %v356
  %584 = vmatprep.subr.mxu0 %v354
  %585 = vmatpush1.msra.mxu0 %v353
  %586 = vmatprep.subr.mxu0 %v351
  %587 = vmatpush1.msra.mxu0 %v350
  %588 = vmatprep.subr.mxu0 %v348
  %589 = vmatpush1.msra.mxu0 %v347
  %590 = vmatprep.subr.mxu0 %v345
  %591 = vmatpush1.msra.mxu0 %v344
  %592 = vmatprep.subr.mxu0 %v342
  %593 = vmatpush1.msra.mxu0 %v341
  %594 = vmatprep.subr.mxu0 %v339
  %595 = vmatpush1.msra.mxu0 %v338
  %596 = vmatprep.subr.mxu0 %v336
  %597 = vmatpush1.msra.mxu0 %v335
  %598 = vmatprep.subr.mxu0 0.0
  %599 = vmatpush2.msra.mxu0 0.0
  %600 = vmatprep.subr.mxu0 0.0
  %601 = vmatpush2.msra.mxu0 0.0
  %602 = vmatprep.subr.mxu0 0.0
  %603 = vmatpush2.msra.mxu0 0.0
  %604 = vmatprep.subr.mxu0 0.0
  %605 = vmatpush2.msra.mxu0 0.0
  %606 = vmatprep.subr.mxu0 0.0
  %607 = vmatpush2.msra.mxu0 0.0
  %608 = vmatprep.subr.mxu0 0.0
  %609 = vmatpush2.msra.mxu0 0.0
  %610 = vmatprep.subr.mxu0 0.0
  %611 = vmatpush2.msra.mxu0 0.0
  %612 = vmatprep.subr.mxu0 0.0
  %613 = vmatpush2.msra.mxu0 0.0
  %614 = vmatprep.subr.mxu0 0.0
  %615 = vmatpush2.msra.mxu0 0.0
  %616 = vmatprep.subr.mxu0 0.0
  %617 = vmatpush2.msra.mxu0 0.0
  %618 = vmatprep.subr.mxu0 0.0
  %619 = vmatpush2.msra.mxu0 0.0
  %620 = vmatprep.subr.mxu0 0.0
  %621 = vmatpush2.msra.mxu0 0.0
  %622 = vmatprep.subr.mxu0 0.0
  %623 = vmatpush2.msra.mxu0 0.0
  %624 = vmatprep.subr.mxu0 0.0
  %625 = vmatpush2.msra.mxu0 0.0
  %626 = vmatprep.subr.mxu0 0.0
  %627 = vmatpush2.msra.mxu0 0.0
  %628 = vmatprep.subr.mxu0 0.0
  %629 = vmatpush2.msra.mxu0 0.0
  %630 = vmatprep.mubr.f32.mxu0 0.0
  %631 = vmatmul.mubr.f32.gmra.mxu0 %v558
  %v632 = vpop.f32.mrf.mxu0
  %v633 = vadd.f32 0.0, %v632
  %v634 = vpop.f32.mrf.mxu0
  %v635 = vadd.f32 0.0, %v634
  %636 = vdwg.mxu0
  %637 = vmatprep.subr.mxu0 0.0
  %638 = vmatpush1.msra.mxu0 %v382
  %639 = vmatprep.subr.mxu0 0.0
  %640 = vmatpush1.msra.mxu0 %v379
  %641 = vmatprep.subr.mxu0 0.0
  %642 = vmatpush1.msra.mxu0 %v376
  %643 = vmatprep.subr.mxu0 0.0
  %644 = vmatpush1.msra.mxu0 %v373
  %645 = vmatprep.subr.mxu0 0.0
  %646 = vmatpush1.msra.mxu0 %v370
  %647 = vmatprep.subr.mxu0 0.0
  %648 = vmatpush1.msra.mxu0 %v367
  %649 = vmatprep.subr.mxu0 0.0
  %650 = vmatpush1.msra.mxu0 %v364
  %651 = vmatprep.subr.mxu0 0.0
  %652 = vmatpush1.msra.mxu0 %v361
  %653 = vmatprep.subr.mxu0 0.0
  %654 = vmatpush1.msra.mxu0 %v358
  %655 = vmatprep.subr.mxu0 0.0
  %656 = vmatpush1.msra.mxu0 %v355
  %657 = vmatprep.subr.mxu0 0.0
  %658 = vmatpush1.msra.mxu0 %v352
  %659 = vmatprep.subr.mxu0 0.0
  %660 = vmatpush1.msra.mxu0 %v349
  %661 = vmatprep.subr.mxu0 0.0
  %662 = vmatpush1.msra.mxu0 %v346
  %663 = vmatprep.subr.mxu0 0.0
  %664 = vmatpush1.msra.mxu0 %v343
  %665 = vmatprep.subr.mxu0 0.0
  %666 = vmatpush1.msra.mxu0 %v340
  %667 = vmatprep.subr.mxu0 0.0
  %668 = vmatpush1.msra.mxu0 %v337
  %669 = vmatprep.subr.mxu0 0.0
  %670 = vmatpush2.msra.mxu0 0.0
  %671 = vmatprep.subr.mxu0 0.0
  %672 = vmatpush2.msra.mxu0 0.0
  %673 = vmatprep.subr.mxu0 0.0
  %674 = vmatpush2.msra.mxu0 0.0
  %675 = vmatprep.subr.mxu0 0.0
  %676 = vmatpush2.msra.mxu0 0.0
  %677 = vmatprep.subr.mxu0 0.0
  %678 = vmatpush2.msra.mxu0 0.0
  %679 = vmatprep.subr.mxu0 0.0
  %680 = vmatpush2.msra.mxu0 0.0
  %681 = vmatprep.subr.mxu0 0.0
  %682 = vmatpush2.msra.mxu0 0.0
  %683 = vmatprep.subr.mxu0 0.0
  %684 = vmatpush2.msra.mxu0 0.0
  %685 = vmatprep.subr.mxu0 0.0
  %686 = vmatpush2.msra.mxu0 0.0
  %687 = vmatprep.subr.mxu0 0.0
  %688 = vmatpush2.msra.mxu0 0.0
  %689 = vmatprep.subr.mxu0 0.0
  %690 = vmatpush2.msra.mxu0 0.0
  %691 = vmatprep.subr.mxu0 0.0
  %692 = vmatpush2.msra.mxu0 0.0
  %693 = vmatprep.subr.mxu0 0.0
  %694 = vmatpush2.msra.mxu0 0.0
  %695 = vmatprep.subr.mxu0 0.0
  %696 = vmatpush2.msra.mxu0 0.0
  %697 = vmatprep.subr.mxu0 0.0
  %698 = vmatpush2.msra.mxu0 0.0
  %699 = vmatprep.subr.mxu0 0.0
  %700 = vmatpush2.msra.mxu0 0.0
  %701 = vmatprep.mubr.f32.mxu0 0.0
  %702 = vmatmul.mubr.f32.gmra.mxu0 %v558
  %v703 = vpop.f32.mrf.mxu0
  %v704 = vadd.f32 0.0, %v703
  %v705 = vpop.f32.mrf.mxu0
  %706 = vdwg.mxu0
  %v707 = vadd.f32 %v563, %v633
  %v708 = vxor.u32 %v707, 2147483648
  %v709 = vmul.f32 %v708, 1.442695
  %v710 = vpow.pop %v709
  %v711 = vadd.f32 %v710, 1.0
  %v712 = vrcp.pop %v711
  %v713 = vmul.f32 1.0, %v712
  %v714 = vadd.f32 %v564, %v635
  %v715 = vxor.u32 %v714, 2147483648
  %v716 = vmul.f32 %v715, 1.442695
  %v717 = vpow.pop %v716
  %v718 = vadd.f32 %v717, 1.0
  %v719 = vrcp.pop %v718
  %v720 = vmul.f32 1.0, %v719
  %v721 = vadd.f32 %v704, %v388
  %v722 = vmul.f32 %v713, %v721
  %v723 = vadd.f32 %v565, %v722
  %v724 = vtanh.pop %v723
  %v725 = vsub.f32 %v558, %v724
  %v726 = vmul.f32 %v720, %v725
  %v727 = vadd.f32 %v724, %v726
  %s728 = scalar_lea.vmem [#allocation4], 8
  %729 = vst [vmem:[%s728] sm:$0xff] %v727
  %s730 = smul.u32 2, 3
  %s731 = smul.addr %s730, 8
  %s732 = scalar_lea.vmem [#allocation3], %s731
  %v733 = vld [vmem:[%s732] sm:$0xff]
  %v734 = vld [vmem:[%s732 + $0x8] sm:$0xff]
  %v735 = vld [vmem:[%s732 + $0x10] sm:$0xff]
  %736 = vmatprep.subr.mxu0 %v381
  %737 = vmatpush1.msra.mxu0 %v380
  %738 = vmatprep.subr.mxu0 %v378
  %739 = vmatpush1.msra.mxu0 %v377
  %740 = vmatprep.subr.mxu0 %v375
  %741 = vmatpush1.msra.mxu0 %v374
  %742 = vmatprep.subr.mxu0 %v372
  %743 = vmatpush1.msra.mxu0 %v371
  %744 = vmatprep.subr.mxu0 %v369
  %745 = vmatpush1.msra.mxu0 %v368
  %746 = vmatprep.subr.mxu0 %v366
  %747 = vmatpush1.msra.mxu0 %v365
  %748 = vmatprep.subr.mxu0 %v363
  %749 = vmatpush1.msra.mxu0 %v362
  %750 = vmatprep.subr.mxu0 %v360
  %751 = vmatpush1.msra.mxu0 %v359
  %752 = vmatprep.subr.mxu0 %v357
  %753 = vmatpush1.msra.mxu0 %v356
  %754 = vmatprep.subr.mxu0 %v354
  %755 = vmatpush1.msra.mxu0 %v353
  %756 = vmatprep.subr.mxu0 %v351
  %757 = vmatpush1.msra.mxu0 %v350
  %758 = vmatprep.subr.mxu0 %v348
  %759 = vmatpush1.msra.mxu0 %v347
  %760 = vmatprep.subr.mxu0 %v345
  %761 = vmatpush1.msra.mxu0 %v344
  %762 = vmatprep.subr.mxu0 %v342
  %763 = vmatpush1.msra.mxu0 %v341
  %764 = vmatprep.subr.mxu0 %v339
  %765 = vmatpush1.msra.mxu0 %v338
  %766 = vmatprep.subr.mxu0 %v336
  %767 = vmatpush1.msra.mxu0 %v335
  %768 = vmatprep.subr.mxu0 0.0
  %769 = vmatpush2.msra.mxu0 0.0
  %770 = vmatprep.subr.mxu0 0.0
  %771 = vmatpush2.msra.mxu0 0.0
  %772 = vmatprep.subr.mxu0 0.0
  %773 = vmatpush2.msra.mxu0 0.0
  %774 = vmatprep.subr.mxu0 0.0
  %775 = vmatpush2.msra.mxu0 0.0
  %776 = vmatprep.subr.mxu0 0.0
  %777 = vmatpush2.msra.mxu0 0.0
  %778 = vmatprep.subr.mxu0 0.0
  %779 = vmatpush2.msra.mxu0 0.0
  %780 = vmatprep.subr.mxu0 0.0
  %781 = vmatpush2.msra.mxu0 0.0
  %782 = vmatprep.subr.mxu0 0.0
  %783 = vmatpush2.msra.mxu0 0.0
  %784 = vmatprep.subr.mxu0 0.0
  %785 = vmatpush2.msra.mxu0 0.0
  %786 = vmatprep.subr.mxu0 0.0
  %787 = vmatpush2.msra.mxu0 0.0
  %788 = vmatprep.subr.mxu0 0.0
  %789 = vmatpush2.msra.mxu0 0.0
  %790 = vmatprep.subr.mxu0 0.0
  %791 = vmatpush2.msra.mxu0 0.0
  %792 = vmatprep.subr.mxu0 0.0
  %793 = vmatpush2.msra.mxu0 0.0
  %794 = vmatprep.subr.mxu0 0.0
  %795 = vmatpush2.msra.mxu0 0.0
  %796 = vmatprep.subr.mxu0 0.0
  %797 = vmatpush2.msra.mxu0 0.0
  %798 = vmatprep.subr.mxu0 0.0
  %799 = vmatpush2.msra.mxu0 0.0
  %800 = vmatprep.mubr.f32.mxu0 0.0
  %801 = vmatmul.mubr.f32.gmra.mxu0 %v727
  %v802 = vpop.f32.mrf.mxu0
  %v803 = vadd.f32 0.0, %v802
  %v804 = vpop.f32.mrf.mxu0
  %v805 = vadd.f32 0.0, %v804
  %806 = vdwg.mxu0
  %807 = vmatprep.subr.mxu0 0.0
  %808 = vmatpush1.msra.mxu0 %v382
  %809 = vmatprep.subr.mxu0 0.0
  %810 = vmatpush1.msra.mxu0 %v379
  %811 = vmatprep.subr.mxu0 0.0
  %812 = vmatpush1.msra.mxu0 %v376
  %813 = vmatprep.subr.mxu0 0.0
  %814 = vmatpush1.msra.mxu0 %v373
  %815 = vmatprep.subr.mxu0 0.0
  %816 = vmatpush1.msra.mxu0 %v370
  %817 = vmatprep.subr.mxu0 0.0
  %818 = vmatpush1.msra.mxu0 %v367
  %819 = vmatprep.subr.mxu0 0.0
  %820 = vmatpush1.msra.mxu0 %v364
  %821 = vmatprep.subr.mxu0 0.0
  %822 = vmatpush1.msra.mxu0 %v361
  %823 = vmatprep.subr.mxu0 0.0
  %824 = vmatpush1.msra.mxu0 %v358
  %825 = vmatprep.subr.mxu0 0.0
  %826 = vmatpush1.msra.mxu0 %v355
  %827 = vmatprep.subr.mxu0 0.0
  %828 = vmatpush1.msra.mxu0 %v352
  %829 = vmatprep.subr.mxu0 0.0
  %830 = vmatpush1.msra.mxu0 %v349
  %831 = vmatprep.subr.mxu0 0.0
  %832 = vmatpush1.msra.mxu0 %v346
  %833 = vmatprep.subr.mxu0 0.0
  %834 = vmatpush1.msra.mxu0 %v343
  %835 = vmatprep.subr.mxu0 0.0
  %836 = vmatpush1.msra.mxu0 %v340
  %837 = vmatprep.subr.mxu0 0.0
  %838 = vmatpush1.msra.mxu0 %v337
  %839 = vmatprep.subr.mxu0 0.0
  %840 = vmatpush2.msra.mxu0 0.0
  %841 = vmatprep.subr.mxu0 0.0
  %842 = vmatpush2.msra.mxu0 0.0
  %843 = vmatprep.subr.mxu0 0.0
  %844 = vmatpush2.msra.mxu0 0.0
  %845 = vmatprep.subr.mxu0 0.0
  %846 = vmatpush2.msra.mxu0 0.0
  %847 = vmatprep.subr.mxu0 0.0
  %848 = vmatpush2.msra.mxu0 0.0
  %849 = vmatprep.subr.mxu0 0.0
  %850 = vmatpush2.msra.mxu0 0.0
  %851 = vmatprep.subr.mxu0 0.0
  %852 = vmatpush2.msra.mxu0 0.0
  %853 = vmatprep.subr.mxu0 0.0
  %854 = vmatpush2.msra.mxu0 0.0
  %855 = vmatprep.subr.mxu0 0.0
  %856 = vmatpush2.msra.mxu0 0.0
  %857 = vmatprep.subr.mxu0 0.0
  %858 = vmatpush2.msra.mxu0 0.0
  %859 = vmatprep.subr.mxu0 0.0
  %860 = vmatpush2.msra.mxu0 0.0
  %861 = vmatprep.subr.mxu0 0.0
  %862 = vmatpush2.msra.mxu0 0.0
  %863 = vmatprep.subr.mxu0 0.0
  %864 = vmatpush2.msra.mxu0 0.0
  %865 = vmatprep.subr.mxu0 0.0
  %866 = vmatpush2.msra.mxu0 0.0
  %867 = vmatprep.subr.mxu0 0.0
  %868 = vmatpush2.msra.mxu0 0.0
  %869 = vmatprep.subr.mxu0 0.0
  %870 = vmatpush2.msra.mxu0 0.0
  %871 = vmatprep.mubr.f32.mxu0 0.0
  %872 = vmatmul.mubr.f32.gmra.mxu0 %v727
  %v873 = vpop.f32.mrf.mxu0
  %v874 = vadd.f32 0.0, %v873
  %v875 = vpop.f32.mrf.mxu0
  %876 = vdwg.mxu0
  %v877 = vadd.f32 %v733, %v803
  %v878 = vxor.u32 %v877, 2147483648
  %v879 = vmul.f32 %v878, 1.442695
  %v880 = vpow.pop %v879
  %v881 = vadd.f32 %v880, 1.0
  %v882 = vrcp.pop %v881
  %v883 = vmul.f32 1.0, %v882
  %v884 = vadd.f32 %v734, %v805
  %v885 = vxor.u32 %v884, 2147483648
  %v886 = vmul.f32 %v885, 1.442695
  %v887 = vpow.pop %v886
  %v888 = vadd.f32 %v887, 1.0
  %v889 = vrcp.pop %v888
  %v890 = vmul.f32 1.0, %v889
  %v891 = vadd.f32 %v874, %v388
  %v892 = vmul.f32 %v883, %v891
  %v893 = vadd.f32 %v735, %v892
  %v894 = vtanh.pop %v893
  %v895 = vsub.f32 %v727, %v894
  %v896 = vmul.f32 %v890, %v895
  %v897 = vadd.f32 %v894, %v896
  %s898 = scalar_lea.vmem [#allocation4], 16
  %899 = vst [vmem:[%s898] sm:$0xff] %v897
  %s900 = smul.u32 3, 3
  %s901 = smul.addr %s900, 8
  %s902 = scalar_lea.vmem [#allocation3], %s901
  %v903 = vld [vmem:[%s902] sm:$0xff]
  %v904 = vld [vmem:[%s902 + $0x8] sm:$0xff]
  %v905 = vld [vmem:[%s902 + $0x10] sm:$0xff]
  %906 = vmatprep.subr.mxu0 %v381
  %907 = vmatpush1.msra.mxu0 %v380
  %908 = vmatprep.subr.mxu0 %v378
  %909 = vmatpush1.msra.mxu0 %v377
  %910 = vmatprep.subr.mxu0 %v375
  %911 = vmatpush1.msra.mxu0 %v374
  %912 = vmatprep.subr.mxu0 %v372
  %913 = vmatpush1.msra.mxu0 %v371
  %914 = vmatprep.subr.mxu0 %v369
  %915 = vmatpush1.msra.mxu0 %v368
  %916 = vmatprep.subr.mxu0 %v366
  %917 = vmatpush1.msra.mxu0 %v365
  %918 = vmatprep.subr.mxu0 %v363
  %919 = vmatpush1.msra.mxu0 %v362
  %920 = vmatprep.subr.mxu0 %v360
  %921 = vmatpush1.msra.mxu0 %v359
  %922 = vmatprep.subr.mxu0 %v357
  %923 = vmatpush1.msra.mxu0 %v356
  %924 = vmatprep.subr.mxu0 %v354
  %925 = vmatpush1.msra.mxu0 %v353
  %926 = vmatprep.subr.mxu0 %v351
  %927 = vmatpush1.msra.mxu0 %v350
  %928 = vmatprep.subr.mxu0 %v348
  %929 = vmatpush1.msra.mxu0 %v347
  %930 = vmatprep.subr.mxu0 %v345
  %931 = vmatpush1.msra.mxu0 %v344
  %932 = vmatprep.subr.mxu0 %v342
  %933 = vmatpush1.msra.mxu0 %v341
  %934 = vmatprep.subr.mxu0 %v339
  %935 = vmatpush1.msra.mxu0 %v338
  %936 = vmatprep.subr.mxu0 %v336
  %937 = vmatpush1.msra.mxu0 %v335
  %938 = vmatprep.subr.mxu0 0.0
  %939 = vmatpush2.msra.mxu0 0.0
  %940 = vmatprep.subr.mxu0 0.0
  %941 = vmatpush2.msra.mxu0 0.0
  %942 = vmatprep.subr.mxu0 0.0
  %943 = vmatpush2.msra.mxu0 0.0
  %944 = vmatprep.subr.mxu0 0.0
  %945 = vmatpush2.msra.mxu0 0.0
  %946 = vmatprep.subr.mxu0 0.0
  %947 = vmatpush2.msra.mxu0 0.0
  %948 = vmatprep.subr.mxu0 0.0
  %949 = vmatpush2.msra.mxu0 0.0
  %950 = vmatprep.subr.mxu0 0.0
  %951 = vmatpush2.msra.mxu0 0.0
  %952 = vmatprep.subr.mxu0 0.0
  %953 = vmatpush2.msra.mxu0 0.0
  %954 = vmatprep.subr.mxu0 0.0
  %955 = vmatpush2.msra.mxu0 0.0
  %956 = vmatprep.subr.mxu0 0.0
  %957 = vmatpush2.msra.mxu0 0.0
  %958 = vmatprep.subr.mxu0 0.0
  %959 = vmatpush2.msra.mxu0 0.0
  %960 = vmatprep.subr.mxu0 0.0
  %961 = vmatpush2.msra.mxu0 0.0
  %962 = vmatprep.subr.mxu0 0.0
  %963 = vmatpush2.msra.mxu0 0.0
  %964 = vmatprep.subr.mxu0 0.0
  %965 = vmatpush2.msra.mxu0 0.0
  %966 = vmatprep.subr.mxu0 0.0
  %967 = vmatpush2.msra.mxu0 0.0
  %968 = vmatprep.subr.mxu0 0.0
  %969 = vmatpush2.msra.mxu0 0.0
  %970 = vmatprep.mubr.f32.mxu0 0.0
  %971 = vmatmul.mubr.f32.gmra.mxu0 %v897
  %v972 = vpop.f32.mrf.mxu0
  %v973 = vadd.f32 0.0, %v972
  %v974 = vpop.f32.mrf.mxu0
  %v975 = vadd.f32 0.0, %v974
  %976 = vdwg.mxu0
  %977 = vmatprep.subr.mxu0 0.0
  %978 = vmatpush1.msra.mxu0 %v382
  %979 = vmatprep.subr.mxu0 0.0
  %980 = vmatpush1.msra.mxu0 %v379
  %981 = vmatprep.subr.mxu0 0.0
  %982 = vmatpush1.msra.mxu0 %v376
  %983 = vmatprep.subr.mxu0 0.0
  %984 = vmatpush1.msra.mxu0 %v373
  %985 = vmatprep.subr.mxu0 0.0
  %986 = vmatpush1.msra.mxu0 %v370
  %987 = vmatprep.subr.mxu0 0.0
  %988 = vmatpush1.msra.mxu0 %v367
  %989 = vmatprep.subr.mxu0 0.0
  %990 = vmatpush1.msra.mxu0 %v364
  %991 = vmatprep.subr.mxu0 0.0
  %992 = vmatpush1.msra.mxu0 %v361
  %993 = vmatprep.subr.mxu0 0.0
  %994 = vmatpush1.msra.mxu0 %v358
  %995 = vmatprep.subr.mxu0 0.0
  %996 = vmatpush1.msra.mxu0 %v355
  %997 = vmatprep.subr.mxu0 0.0
  %998 = vmatpush1.msra.mxu0 %v352
  %999 = vmatprep.subr.mxu0 0.0
  %1000 = vmatpush1.msra.mxu0 %v349
  %1001 = vmatprep.subr.mxu0 0.0
  %1002 = vmatpush1.msra.mxu0 %v346
  %1003 = vmatprep.subr.mxu0 0.0
  %1004 = vmatpush1.msra.mxu0 %v343
  %1005 = vmatprep.subr.mxu0 0.0
  %1006 = vmatpush1.msra.mxu0 %v340
  %1007 = vmatprep.subr.mxu0 0.0
  %1008 = vmatpush1.msra.mxu0 %v337
  %1009 = vmatprep.subr.mxu0 0.0
  %1010 = vmatpush2.msra.mxu0 0.0
  %1011 = vmatprep.subr.mxu0 0.0
  %1012 = vmatpush2.msra.mxu0 0.0
  %1013 = vmatprep.subr.mxu0 0.0
  %1014 = vmatpush2.msra.mxu0 0.0
  %1015 = vmatprep.subr.mxu0 0.0
  %1016 = vmatpush2.msra.mxu0 0.0
  %1017 = vmatprep.subr.mxu0 0.0
  %1018 = vmatpush2.msra.mxu0 0.0
  %1019 = vmatprep.subr.mxu0 0.0
  %1020 = vmatpush2.msra.mxu0 0.0
  %1021 = vmatprep.subr.mxu0 0.0
  %1022 = vmatpush2.msra.mxu0 0.0
  %1023 = vmatprep.subr.mxu0 0.0
  %1024 = vmatpush2.msra.mxu0 0.0
  %1025 = vmatprep.subr.mxu0 0.0
  %1026 = vmatpush2.msra.mxu0 0.0
  %1027 = vmatprep.subr.mxu0 0.0
  %1028 = vmatpush2.msra.mxu0 0.0
  %1029 = vmatprep.subr.mxu0 0.0
  %1030 = vmatpush2.msra.mxu0 0.0
  %1031 = vmatprep.subr.mxu0 0.0
  %1032 = vmatpush2.msra.mxu0 0.0
  %1033 = vmatprep.subr.mxu0 0.0
  %1034 = vmatpush2.msra.mxu0 0.0
  %1035 = vmatprep.subr.mxu0 0.0
  %1036 = vmatpush2.msra.mxu0 0.0
  %1037 = vmatprep.subr.mxu0 0.0
  %1038 = vmatpush2.msra.mxu0 0.0
  %1039 = vmatprep.subr.mxu0 0.0
  %1040 = vmatpush2.msra.mxu0 0.0
  %1041 = vmatprep.mubr.f32.mxu0 0.0
  %1042 = vmatmul.mubr.f32.gmra.mxu0 %v897
  %v1043 = vpop.f32.mrf.mxu0
  %v1044 = vadd.f32 0.0, %v1043
  %v1045 = vpop.f32.mrf.mxu0
  %1046 = vdwg.mxu0
  %v1047 = vadd.f32 %v903, %v973
  %v1048 = vxor.u32 %v1047, 2147483648
  %v1049 = vmul.f32 %v1048, 1.442695
  %v1050 = vpow.pop %v1049
  %v1051 = vadd.f32 %v1050, 1.0
  %v1052 = vrcp.pop %v1051
  %v1053 = vmul.f32 1.0, %v1052
  %v1054 = vadd.f32 %v904, %v975
  %v1055 = vxor.u32 %v1054, 2147483648
  %v1056 = vmul.f32 %v1055, 1.442695
  %v1057 = vpow.pop %v1056
  %v1058 = vadd.f32 %v1057, 1.0
  %v1059 = vrcp.pop %v1058
  %v1060 = vmul.f32 1.0, %v1059
  %v1061 = vadd.f32 %v1044, %v388
  %v1062 = vmul.f32 %v1053, %v1061
  %v1063 = vadd.f32 %v905, %v1062
  %v1064 = vtanh.pop %v1063
  %v1065 = vsub.f32 %v897, %v1064
  %v1066 = vmul.f32 %v1060, %v1065
  %v1067 = vadd.f32 %v1064, %v1066
  %s1068 = scalar_lea.vmem [#allocation4], 24
  %1069 = vst [vmem:[%s1068] sm:$0xff] %v1067
  %s1070 = smul.u32 4, 3
  %s1071 = smul.addr %s1070, 8
  %s1072 = scalar_lea.vmem [#allocation3], %s1071
  %v1073 = vld [vmem:[%s1072] sm:$0xff]
  %v1074 = vld [vmem:[%s1072 + $0x8] sm:$0xff]
  %v1075 = vld [vmem:[%s1072 + $0x10] sm:$0xff]
  %1076 = vmatprep.subr.mxu0 %v381
  %1077 = vmatpush1.msra.mxu0 %v380
  %1078 = vmatprep.subr.mxu0 %v378
  %1079 = vmatpush1.msra.mxu0 %v377
  %1080 = vmatprep.subr.mxu0 %v375
  %1081 = vmatpush1.msra.mxu0 %v374
  %1082 = vmatprep.subr.mxu0 %v372
  %1083 = vmatpush1.msra.mxu0 %v371
  %1084 = vmatprep.subr.mxu0 %v369
  %1085 = vmatpush1.msra.mxu0 %v368
  %1086 = vmatprep.subr.mxu0 %v366
  %1087 = vmatpush1.msra.mxu0 %v365
  %1088 = vmatprep.subr.mxu0 %v363
  %1089 = vmatpush1.msra.mxu0 %v362
  %1090 = vmatprep.subr.mxu0 %v360
  %1091 = vmatpush1.msra.mxu0 %v359
  %1092 = vmatprep.subr.mxu0 %v357
  %1093 = vmatpush1.msra.mxu0 %v356
  %1094 = vmatprep.subr.mxu0 %v354
  %1095 = vmatpush1.msra.mxu0 %v353
  %1096 = vmatprep.subr.mxu0 %v351
  %1097 = vmatpush1.msra.mxu0 %v350
  %1098 = vmatprep.subr.mxu0 %v348
  %1099 = vmatpush1.msra.mxu0 %v347
  %1100 = vmatprep.subr.mxu0 %v345
  %1101 = vmatpush1.msra.mxu0 %v344
  %1102 = vmatprep.subr.mxu0 %v342
  %1103 = vmatpush1.msra.mxu0 %v341
  %1104 = vmatprep.subr.mxu0 %v339
  %1105 = vmatpush1.msra.mxu0 %v338
  %1106 = vmatprep.subr.mxu0 %v336
  %1107 = vmatpush1.msra.mxu0 %v335
  %1108 = vmatprep.subr.mxu0 0.0
  %1109 = vmatpush2.msra.mxu0 0.0
  %1110 = vmatprep.subr.mxu0 0.0
  %1111 = vmatpush2.msra.mxu0 0.0
  %1112 = vmatprep.subr.mxu0 0.0
  %1113 = vmatpush2.msra.mxu0 0.0
  %1114 = vmatprep.subr.mxu0 0.0
  %1115 = vmatpush2.msra.mxu0 0.0
  %1116 = vmatprep.subr.mxu0 0.0
  %1117 = vmatpush2.msra.mxu0 0.0
  %1118 = vmatprep.subr.mxu0 0.0
  %1119 = vmatpush2.msra.mxu0 0.0
  %1120 = vmatprep.subr.mxu0 0.0
  %1121 = vmatpush2.msra.mxu0 0.0
  %1122 = vmatprep.subr.mxu0 0.0
  %1123 = vmatpush2.msra.mxu0 0.0
  %1124 = vmatprep.subr.mxu0 0.0
  %1125 = vmatpush2.msra.mxu0 0.0
  %1126 = vmatprep.subr.mxu0 0.0
  %1127 = vmatpush2.msra.mxu0 0.0
  %1128 = vmatprep.subr.mxu0 0.0
  %1129 = vmatpush2.msra.mxu0 0.0
  %1130 = vmatprep.subr.mxu0 0.0
  %1131 = vmatpush2.msra.mxu0 0.0
  %1132 = vmatprep.subr.mxu0 0.0
  %1133 = vmatpush2.msra.mxu0 0.0
  %1134 = vmatprep.subr.mxu0 0.0
  %1135 = vmatpush2.msra.mxu0 0.0
  %1136 = vmatprep.subr.mxu0 0.0
  %1137 = vmatpush2.msra.mxu0 0.0
  %1138 = vmatprep.subr.mxu0 0.0
  %1139 = vmatpush2.msra.mxu0 0.0
  %1140 = vmatprep.mubr.f32.mxu0 0.0
  %1141 = vmatmul.mubr.f32.gmra.mxu0 %v1067
  %v1142 = vpop.f32.mrf.mxu0
  %v1143 = vadd.f32 0.0, %v1142
  %v1144 = vpop.f32.mrf.mxu0
  %v1145 = vadd.f32 0.0, %v1144
  %1146 = vdwg.mxu0
  %1147 = vmatprep.subr.mxu0 0.0
  %1148 = vmatpush1.msra.mxu0 %v382
  %1149 = vmatprep.subr.mxu0 0.0
  %1150 = vmatpush1.msra.mxu0 %v379
  %1151 = vmatprep.subr.mxu0 0.0
  %1152 = vmatpush1.msra.mxu0 %v376
  %1153 = vmatprep.subr.mxu0 0.0
  %1154 = vmatpush1.msra.mxu0 %v373
  %1155 = vmatprep.subr.mxu0 0.0
  %1156 = vmatpush1.msra.mxu0 %v370
  %1157 = vmatprep.subr.mxu0 0.0
  %1158 = vmatpush1.msra.mxu0 %v367
  %1159 = vmatprep.subr.mxu0 0.0
  %1160 = vmatpush1.msra.mxu0 %v364
  %1161 = vmatprep.subr.mxu0 0.0
  %1162 = vmatpush1.msra.mxu0 %v361
  %1163 = vmatprep.subr.mxu0 0.0
  %1164 = vmatpush1.msra.mxu0 %v358
  %1165 = vmatprep.subr.mxu0 0.0
  %1166 = vmatpush1.msra.mxu0 %v355
  %1167 = vmatprep.subr.mxu0 0.0
  %1168 = vmatpush1.msra.mxu0 %v352
  %1169 = vmatprep.subr.mxu0 0.0
  %1170 = vmatpush1.msra.mxu0 %v349
  %1171 = vmatprep.subr.mxu0 0.0
  %1172 = vmatpush1.msra.mxu0 %v346
  %1173 = vmatprep.subr.mxu0 0.0
  %1174 = vmatpush1.msra.mxu0 %v343
  %1175 = vmatprep.subr.mxu0 0.0
  %1176 = vmatpush1.msra.mxu0 %v340
  %1177 = vmatprep.subr.mxu0 0.0
  %1178 = vmatpush1.msra.mxu0 %v337
  %1179 = vmatprep.subr.mxu0 0.0
  %1180 = vmatpush2.msra.mxu0 0.0
  %1181 = vmatprep.subr.mxu0 0.0
  %1182 = vmatpush2.msra.mxu0 0.0
  %1183 = vmatprep.subr.mxu0 0.0
  %1184 = vmatpush2.msra.mxu0 0.0
  %1185 = vmatprep.subr.mxu0 0.0
  %1186 = vmatpush2.msra.mxu0 0.0
  %1187 = vmatprep.subr.mxu0 0.0
  %1188 = vmatpush2.msra.mxu0 0.0
  %1189 = vmatprep.subr.mxu0 0.0
  %1190 = vmatpush2.msra.mxu0 0.0
  %1191 = vmatprep.subr.mxu0 0.0
  %1192 = vmatpush2.msra.mxu0 0.0
  %1193 = vmatprep.subr.mxu0 0.0
  %1194 = vmatpush2.msra.mxu0 0.0
  %1195 = vmatprep.subr.mxu0 0.0
  %1196 = vmatpush2.msra.mxu0 0.0
  %1197 = vmatprep.subr.mxu0 0.0
  %1198 = vmatpush2.msra.mxu0 0.0
  %1199 = vmatprep.subr.mxu0 0.0
  %1200 = vmatpush2.msra.mxu0 0.0
  %1201 = vmatprep.subr.mxu0 0.0
  %1202 = vmatpush2.msra.mxu0 0.0
  %1203 = vmatprep.subr.mxu0 0.0
  %1204 = vmatpush2.msra.mxu0 0.0
  %1205 = vmatprep.subr.mxu0 0.0
  %1206 = vmatpush2.msra.mxu0 0.0
  %1207 = vmatprep.subr.mxu0 0.0
  %1208 = vmatpush2.msra.mxu0 0.0
  %1209 = vmatprep.subr.mxu0 0.0
  %1210 = vmatpush2.msra.mxu0 0.0
  %1211 = vmatprep.mubr.f32.mxu0 0.0
  %1212 = vmatmul.mubr.f32.gmra.mxu0 %v1067
  %v1213 = vpop.f32.mrf.mxu0
  %v1214 = vadd.f32 0.0, %v1213
  %v1215 = vpop.f32.mrf.mxu0
  %1216 = vdwg.mxu0
  %v1217 = vadd.f32 %v1073, %v1143
  %v1218 = vxor.u32 %v1217, 2147483648
  %v1219 = vmul.f32 %v1218, 1.442695
  %v1220 = vpow.pop %v1219
  %v1221 = vadd.f32 %v1220, 1.0
  %v1222 = vrcp.pop %v1221
  %v1223 = vmul.f32 1.0, %v1222
  %v1224 = vadd.f32 %v1074, %v1145
  %v1225 = vxor.u32 %v1224, 2147483648
  %v1226 = vmul.f32 %v1225, 1.442695
  %v1227 = vpow.pop %v1226
  %v1228 = vadd.f32 %v1227, 1.0
  %v1229 = vrcp.pop %v1228
  %v1230 = vmul.f32 1.0, %v1229
  %v1231 = vadd.f32 %v1214, %v388
  %v1232 = vmul.f32 %v1223, %v1231
  %v1233 = vadd.f32 %v1075, %v1232
  %v1234 = vtanh.pop %v1233
  %v1235 = vsub.f32 %v1067, %v1234
  %v1236 = vmul.f32 %v1230, %v1235
  %v1237 = vadd.f32 %v1234, %v1236
  %s1238 = scalar_lea.vmem [#allocation4], 32
  %1239 = vst [vmem:[%s1238] sm:$0xff] %v1237
  %s1240 = smul.u32 5, 3
  %s1241 = smul.addr %s1240, 8
  %s1242 = scalar_lea.vmem [#allocation3], %s1241
  %v1243 = vld [vmem:[%s1242] sm:$0xff]
  %v1244 = vld [vmem:[%s1242 + $0x8] sm:$0xff]
  %v1245 = vld [vmem:[%s1242 + $0x10] sm:$0xff]
  %1246 = vmatprep.subr.mxu0 %v381
  %1247 = vmatpush1.msra.mxu0 %v380
  %1248 = vmatprep.subr.mxu0 %v378
  %1249 = vmatpush1.msra.mxu0 %v377
  %1250 = vmatprep.subr.mxu0 %v375
  %1251 = vmatpush1.msra.mxu0 %v374
  %1252 = vmatprep.subr.mxu0 %v372
  %1253 = vmatpush1.msra.mxu0 %v371
  %1254 = vmatprep.subr.mxu0 %v369
  %1255 = vmatpush1.msra.mxu0 %v368
  %1256 = vmatprep.subr.mxu0 %v366
  %1257 = vmatpush1.msra.mxu0 %v365
  %1258 = vmatprep.subr.mxu0 %v363
  %1259 = vmatpush1.msra.mxu0 %v362
  %1260 = vmatprep.subr.mxu0 %v360
  %1261 = vmatpush1.msra.mxu0 %v359
  %1262 = vmatprep.subr.mxu0 %v357
  %1263 = vmatpush1.msra.mxu0 %v356
  %1264 = vmatprep.subr.mxu0 %v354
  %1265 = vmatpush1.msra.mxu0 %v353
  %1266 = vmatprep.subr.mxu0 %v351
  %1267 = vmatpush1.msra.mxu0 %v350
  %1268 = vmatprep.subr.mxu0 %v348
  %1269 = vmatpush1.msra.mxu0 %v347
  %1270 = vmatprep.subr.mxu0 %v345
  %1271 = vmatpush1.msra.mxu0 %v344
  %1272 = vmatprep.subr.mxu0 %v342
  %1273 = vmatpush1.msra.mxu0 %v341
  %1274 = vmatprep.subr.mxu0 %v339
  %1275 = vmatpush1.msra.mxu0 %v338
  %1276 = vmatprep.subr.mxu0 %v336
  %1277 = vmatpush1.msra.mxu0 %v335
  %1278 = vmatprep.subr.mxu0 0.0
  %1279 = vmatpush2.msra.mxu0 0.0
  %1280 = vmatprep.subr.mxu0 0.0
  %1281 = vmatpush2.msra.mxu0 0.0
  %1282 = vmatprep.subr.mxu0 0.0
  %1283 = vmatpush2.msra.mxu0 0.0
  %1284 = vmatprep.subr.mxu0 0.0
  %1285 = vmatpush2.msra.mxu0 0.0
  %1286 = vmatprep.subr.mxu0 0.0
  %1287 = vmatpush2.msra.mxu0 0.0
  %1288 = vmatprep.subr.mxu0 0.0
  %1289 = vmatpush2.msra.mxu0 0.0
  %1290 = vmatprep.subr.mxu0 0.0
  %1291 = vmatpush2.msra.mxu0 0.0
  %1292 = vmatprep.subr.mxu0 0.0
  %1293 = vmatpush2.msra.mxu0 0.0
  %1294 = vmatprep.subr.mxu0 0.0
  %1295 = vmatpush2.msra.mxu0 0.0
  %1296 = vmatprep.subr.mxu0 0.0
  %1297 = vmatpush2.msra.mxu0 0.0
  %1298 = vmatprep.subr.mxu0 0.0
  %1299 = vmatpush2.msra.mxu0 0.0
  %1300 = vmatprep.subr.mxu0 0.0
  %1301 = vmatpush2.msra.mxu0 0.0
  %1302 = vmatprep.subr.mxu0 0.0
  %1303 = vmatpush2.msra.mxu0 0.0
  %1304 = vmatprep.subr.mxu0 0.0
  %1305 = vmatpush2.msra.mxu0 0.0
  %1306 = vmatprep.subr.mxu0 0.0
  %1307 = vmatpush2.msra.mxu0 0.0
  %1308 = vmatprep.subr.mxu0 0.0
  %1309 = vmatpush2.msra.mxu0 0.0
  %1310 = vmatprep.mubr.f32.mxu0 0.0
  %1311 = vmatmul.mubr.f32.gmra.mxu0 %v1237
  %v1312 = vpop.f32.mrf.mxu0
  %v1313 = vadd.f32 0.0, %v1312
  %v1314 = vpop.f32.mrf.mxu0
  %v1315 = vadd.f32 0.0, %v1314
  %1316 = vdwg.mxu0
  %1317 = vmatprep.subr.mxu0 0.0
  %1318 = vmatpush1.msra.mxu0 %v382
  %1319 = vmatprep.subr.mxu0 0.0
  %1320 = vmatpush1.msra.mxu0 %v379
  %1321 = vmatprep.subr.mxu0 0.0
  %1322 = vmatpush1.msra.mxu0 %v376
  %1323 = vmatprep.subr.mxu0 0.0
  %1324 = vmatpush1.msra.mxu0 %v373
  %1325 = vmatprep.subr.mxu0 0.0
  %1326 = vmatpush1.msra.mxu0 %v370
  %1327 = vmatprep.subr.mxu0 0.0
  %1328 = vmatpush1.msra.mxu0 %v367
  %1329 = vmatprep.subr.mxu0 0.0
  %1330 = vmatpush1.msra.mxu0 %v364
  %1331 = vmatprep.subr.mxu0 0.0
  %1332 = vmatpush1.msra.mxu0 %v361
  %1333 = vmatprep.subr.mxu0 0.0
  %1334 = vmatpush1.msra.mxu0 %v358
  %1335 = vmatprep.subr.mxu0 0.0
  %1336 = vmatpush1.msra.mxu0 %v355
  %1337 = vmatprep.subr.mxu0 0.0
  %1338 = vmatpush1.msra.mxu0 %v352
  %1339 = vmatprep.subr.mxu0 0.0
  %1340 = vmatpush1.msra.mxu0 %v349
  %1341 = vmatprep.subr.mxu0 0.0
  %1342 = vmatpush1.msra.mxu0 %v346
  %1343 = vmatprep.subr.mxu0 0.0
  %1344 = vmatpush1.msra.mxu0 %v343
  %1345 = vmatprep.subr.mxu0 0.0
  %1346 = vmatpush1.msra.mxu0 %v340
  %1347 = vmatprep.subr.mxu0 0.0
  %1348 = vmatpush1.msra.mxu0 %v337
  %1349 = vmatprep.subr.mxu0 0.0
  %1350 = vmatpush2.msra.mxu0 0.0
  %1351 = vmatprep.subr.mxu0 0.0
  %1352 = vmatpush2.msra.mxu0 0.0
  %1353 = vmatprep.subr.mxu0 0.0
  %1354 = vmatpush2.msra.mxu0 0.0
  %1355 = vmatprep.subr.mxu0 0.0
  %1356 = vmatpush2.msra.mxu0 0.0
  %1357 = vmatprep.subr.mxu0 0.0
  %1358 = vmatpush2.msra.mxu0 0.0
  %1359 = vmatprep.subr.mxu0 0.0
  %1360 = vmatpush2.msra.mxu0 0.0
  %1361 = vmatprep.subr.mxu0 0.0
  %1362 = vmatpush2.msra.mxu0 0.0
  %1363 = vmatprep.subr.mxu0 0.0
  %1364 = vmatpush2.msra.mxu0 0.0
  %1365 = vmatprep.subr.mxu0 0.0
  %1366 = vmatpush2.msra.mxu0 0.0
  %1367 = vmatprep.subr.mxu0 0.0
  %1368 = vmatpush2.msra.mxu0 0.0
  %1369 = vmatprep.subr.mxu0 0.0
  %1370 = vmatpush2.msra.mxu0 0.0
  %1371 = vmatprep.subr.mxu0 0.0
  %1372 = vmatpush2.msra.mxu0 0.0
  %1373 = vmatprep.subr.mxu0 0.0
  %1374 = vmatpush2.msra.mxu0 0.0
  %1375 = vmatprep.subr.mxu0 0.0
  %1376 = vmatpush2.msra.mxu0 0.0
  %1377 = vmatprep.subr.mxu0 0.0
  %1378 = vmatpush2.msra.mxu0 0.0
  %1379 = vmatprep.subr.mxu0 0.0
  %1380 = vmatpush2.msra.mxu0 0.0
  %1381 = vmatprep.mubr.f32.mxu0 0.0
  %1382 = vmatmul.mubr.f32.gmra.mxu0 %v1237
  %v1383 = vpop.f32.mrf.mxu0
  %v1384 = vadd.f32 0.0, %v1383
  %v1385 = vpop.f32.mrf.mxu0
  %1386 = vdwg.mxu0
  %v1387 = vadd.f32 %v1243, %v1313
  %v1388 = vxor.u32 %v1387, 2147483648
  %v1389 = vmul.f32 %v1388, 1.442695
  %v1390 = vpow.pop %v1389
  %v1391 = vadd.f32 %v1390, 1.0
  %v1392 = vrcp.pop %v1391
  %v1393 = vmul.f32 1.0, %v1392
  %v1394 = vadd.f32 %v1244, %v1315
  %v1395 = vxor.u32 %v1394, 2147483648
  %v1396 = vmul.f32 %v1395, 1.442695
  %v1397 = vpow.pop %v1396
  %v1398 = vadd.f32 %v1397, 1.0
  %v1399 = vrcp.pop %v1398
  %v1400 = vmul.f32 1.0, %v1399
  %v1401 = vadd.f32 %v1384, %v388
  %v1402 = vmul.f32 %v1393, %v1401
  %v1403 = vadd.f32 %v1245, %v1402
  %v1404 = vtanh.pop %v1403
  %v1405 = vsub.f32 %v1237, %v1404
  %v1406 = vmul.f32 %v1400, %v1405
  %v1407 = vadd.f32 %v1404, %v1406
  %s1408 = scalar_lea.vmem [#allocation4], 40
  %1409 = vst [vmem:[%s1408] sm:$0xff] %v1407
  %s1410 = smul.u32 6, 3
  %s1411 = smul.addr %s1410, 8
  %s1412 = scalar_lea.vmem [#allocation3], %s1411
  %v1413 = vld [vmem:[%s1412] sm:$0xff]
  %v1414 = vld [vmem:[%s1412 + $0x8] sm:$0xff]
  %v1415 = vld [vmem:[%s1412 + $0x10] sm:$0xff]
  %1416 = vmatprep.subr.mxu0 %v381
  %1417 = vmatpush1.msra.mxu0 %v380
  %1418 = vmatprep.subr.mxu0 %v378
  %1419 = vmatpush1.msra.mxu0 %v377
  %1420 = vmatprep.subr.mxu0 %v375
  %1421 = vmatpush1.msra.mxu0 %v374
  %1422 = vmatprep.subr.mxu0 %v372
  %1423 = vmatpush1.msra.mxu0 %v371
  %1424 = vmatprep.subr.mxu0 %v369
  %1425 = vmatpush1.msra.mxu0 %v368
  %1426 = vmatprep.subr.mxu0 %v366
  %1427 = vmatpush1.msra.mxu0 %v365
  %1428 = vmatprep.subr.mxu0 %v363
  %1429 = vmatpush1.msra.mxu0 %v362
  %1430 = vmatprep.subr.mxu0 %v360
  %1431 = vmatpush1.msra.mxu0 %v359
  %1432 = vmatprep.subr.mxu0 %v357
  %1433 = vmatpush1.msra.mxu0 %v356
  %1434 = vmatprep.subr.mxu0 %v354
  %1435 = vmatpush1.msra.mxu0 %v353
  %1436 = vmatprep.subr.mxu0 %v351
  %1437 = vmatpush1.msra.mxu0 %v350
  %1438 = vmatprep.subr.mxu0 %v348
  %1439 = vmatpush1.msra.mxu0 %v347
  %1440 = vmatprep.subr.mxu0 %v345
  %1441 = vmatpush1.msra.mxu0 %v344
  %1442 = vmatprep.subr.mxu0 %v342
  %1443 = vmatpush1.msra.mxu0 %v341
  %1444 = vmatprep.subr.mxu0 %v339
  %1445 = vmatpush1.msra.mxu0 %v338
  %1446 = vmatprep.subr.mxu0 %v336
  %1447 = vmatpush1.msra.mxu0 %v335
  %1448 = vmatprep.subr.mxu0 0.0
  %1449 = vmatpush2.msra.mxu0 0.0
  %1450 = vmatprep.subr.mxu0 0.0
  %1451 = vmatpush2.msra.mxu0 0.0
  %1452 = vmatprep.subr.mxu0 0.0
  %1453 = vmatpush2.msra.mxu0 0.0
  %1454 = vmatprep.subr.mxu0 0.0
  %1455 = vmatpush2.msra.mxu0 0.0
  %1456 = vmatprep.subr.mxu0 0.0
  %1457 = vmatpush2.msra.mxu0 0.0
  %1458 = vmatprep.subr.mxu0 0.0
  %1459 = vmatpush2.msra.mxu0 0.0
  %1460 = vmatprep.subr.mxu0 0.0
  %1461 = vmatpush2.msra.mxu0 0.0
  %1462 = vmatprep.subr.mxu0 0.0
  %1463 = vmatpush2.msra.mxu0 0.0
  %1464 = vmatprep.subr.mxu0 0.0
  %1465 = vmatpush2.msra.mxu0 0.0
  %1466 = vmatprep.subr.mxu0 0.0
  %1467 = vmatpush2.msra.mxu0 0.0
  %1468 = vmatprep.subr.mxu0 0.0
  %1469 = vmatpush2.msra.mxu0 0.0
  %1470 = vmatprep.subr.mxu0 0.0
  %1471 = vmatpush2.msra.mxu0 0.0
  %1472 = vmatprep.subr.mxu0 0.0
  %1473 = vmatpush2.msra.mxu0 0.0
  %1474 = vmatprep.subr.mxu0 0.0
  %1475 = vmatpush2.msra.mxu0 0.0
  %1476 = vmatprep.subr.mxu0 0.0
  %1477 = vmatpush2.msra.mxu0 0.0
  %1478 = vmatprep.subr.mxu0 0.0
  %1479 = vmatpush2.msra.mxu0 0.0
  %1480 = vmatprep.mubr.f32.mxu0 0.0
  %1481 = vmatmul.mubr.f32.gmra.mxu0 %v1407
  %v1482 = vpop.f32.mrf.mxu0
  %v1483 = vadd.f32 0.0, %v1482
  %v1484 = vpop.f32.mrf.mxu0
  %v1485 = vadd.f32 0.0, %v1484
  %1486 = vdwg.mxu0
  %1487 = vmatprep.subr.mxu0 0.0
  %1488 = vmatpush1.msra.mxu0 %v382
  %1489 = vmatprep.subr.mxu0 0.0
  %1490 = vmatpush1.msra.mxu0 %v379
  %1491 = vmatprep.subr.mxu0 0.0
  %1492 = vmatpush1.msra.mxu0 %v376
  %1493 = vmatprep.subr.mxu0 0.0
  %1494 = vmatpush1.msra.mxu0 %v373
  %1495 = vmatprep.subr.mxu0 0.0
  %1496 = vmatpush1.msra.mxu0 %v370
  %1497 = vmatprep.subr.mxu0 0.0
  %1498 = vmatpush1.msra.mxu0 %v367
  %1499 = vmatprep.subr.mxu0 0.0
  %1500 = vmatpush1.msra.mxu0 %v364
  %1501 = vmatprep.subr.mxu0 0.0
  %1502 = vmatpush1.msra.mxu0 %v361
  %1503 = vmatprep.subr.mxu0 0.0
  %1504 = vmatpush1.msra.mxu0 %v358
  %1505 = vmatprep.subr.mxu0 0.0
  %1506 = vmatpush1.msra.mxu0 %v355
  %1507 = vmatprep.subr.mxu0 0.0
  %1508 = vmatpush1.msra.mxu0 %v352
  %1509 = vmatprep.subr.mxu0 0.0
  %1510 = vmatpush1.msra.mxu0 %v349
  %1511 = vmatprep.subr.mxu0 0.0
  %1512 = vmatpush1.msra.mxu0 %v346
  %1513 = vmatprep.subr.mxu0 0.0
  %1514 = vmatpush1.msra.mxu0 %v343
  %1515 = vmatprep.subr.mxu0 0.0
  %1516 = vmatpush1.msra.mxu0 %v340
  %1517 = vmatprep.subr.mxu0 0.0
  %1518 = vmatpush1.msra.mxu0 %v337
  %1519 = vmatprep.subr.mxu0 0.0
  %1520 = vmatpush2.msra.mxu0 0.0
  %1521 = vmatprep.subr.mxu0 0.0
  %1522 = vmatpush2.msra.mxu0 0.0
  %1523 = vmatprep.subr.mxu0 0.0
  %1524 = vmatpush2.msra.mxu0 0.0
  %1525 = vmatprep.subr.mxu0 0.0
  %1526 = vmatpush2.msra.mxu0 0.0
  %1527 = vmatprep.subr.mxu0 0.0
  %1528 = vmatpush2.msra.mxu0 0.0
  %1529 = vmatprep.subr.mxu0 0.0
  %1530 = vmatpush2.msra.mxu0 0.0
  %1531 = vmatprep.subr.mxu0 0.0
  %1532 = vmatpush2.msra.mxu0 0.0
  %1533 = vmatprep.subr.mxu0 0.0
  %1534 = vmatpush2.msra.mxu0 0.0
  %1535 = vmatprep.subr.mxu0 0.0
  %1536 = vmatpush2.msra.mxu0 0.0
  %1537 = vmatprep.subr.mxu0 0.0
  %1538 = vmatpush2.msra.mxu0 0.0
  %1539 = vmatprep.subr.mxu0 0.0
  %1540 = vmatpush2.msra.mxu0 0.0
  %1541 = vmatprep.subr.mxu0 0.0
  %1542 = vmatpush2.msra.mxu0 0.0
  %1543 = vmatprep.subr.mxu0 0.0
  %1544 = vmatpush2.msra.mxu0 0.0
  %1545 = vmatprep.subr.mxu0 0.0
  %1546 = vmatpush2.msra.mxu0 0.0
  %1547 = vmatprep.subr.mxu0 0.0
  %1548 = vmatpush2.msra.mxu0 0.0
  %1549 = vmatprep.subr.mxu0 0.0
  %1550 = vmatpush2.msra.mxu0 0.0
  %1551 = vmatprep.mubr.f32.mxu0 0.0
  %1552 = vmatmul.mubr.f32.gmra.mxu0 %v1407
  %v1553 = vpop.f32.mrf.mxu0
  %v1554 = vadd.f32 0.0, %v1553
  %v1555 = vpop.f32.mrf.mxu0
  %1556 = vdwg.mxu0
  %v1557 = vadd.f32 %v1413, %v1483
  %v1558 = vxor.u32 %v1557, 2147483648
  %v1559 = vmul.f32 %v1558, 1.442695
  %v1560 = vpow.pop %v1559
  %v1561 = vadd.f32 %v1560, 1.0
  %v1562 = vrcp.pop %v1561
  %v1563 = vmul.f32 1.0, %v1562
  %v1564 = vadd.f32 %v1414, %v1485
  %v1565 = vxor.u32 %v1564, 2147483648
  %v1566 = vmul.f32 %v1565, 1.442695
  %v1567 = vpow.pop %v1566
  %v1568 = vadd.f32 %v1567, 1.0
  %v1569 = vrcp.pop %v1568
  %v1570 = vmul.f32 1.0, %v1569
  %v1571 = vadd.f32 %v1554, %v388
  %v1572 = vmul.f32 %v1563, %v1571
  %v1573 = vadd.f32 %v1415, %v1572
  %v1574 = vtanh.pop %v1573
  %v1575 = vsub.f32 %v1407, %v1574
  %v1576 = vmul.f32 %v1570, %v1575
  %v1577 = vadd.f32 %v1574, %v1576
  %s1578 = scalar_lea.vmem [#allocation4], 48
  %1579 = vst [vmem:[%s1578] sm:$0xff] %v1577
  %s1580 = smul.u32 7, 3
  %s1581 = smul.addr %s1580, 8
  %s1582 = scalar_lea.vmem [#allocation3], %s1581
  %v1583 = vld [vmem:[%s1582] sm:$0xff]
  %v1584 = vld [vmem:[%s1582 + $0x8] sm:$0xff]
  %v1585 = vld [vmem:[%s1582 + $0x10] sm:$0xff]
  %1586 = vmatprep.subr.mxu0 %v381
  %1587 = vmatpush1.msra.mxu0 %v380
  %1588 = vmatprep.subr.mxu0 %v378
  %1589 = vmatpush1.msra.mxu0 %v377
  %1590 = vmatprep.subr.mxu0 %v375
  %1591 = vmatpush1.msra.mxu0 %v374
  %1592 = vmatprep.subr.mxu0 %v372
  %1593 = vmatpush1.msra.mxu0 %v371
  %1594 = vmatprep.subr.mxu0 %v369
  %1595 = vmatpush1.msra.mxu0 %v368
  %1596 = vmatprep.subr.mxu0 %v366
  %1597 = vmatpush1.msra.mxu0 %v365
  %1598 = vmatprep.subr.mxu0 %v363
  %1599 = vmatpush1.msra.mxu0 %v362
  %1600 = vmatprep.subr.mxu0 %v360
  %1601 = vmatpush1.msra.mxu0 %v359
  %1602 = vmatprep.subr.mxu0 %v357
  %1603 = vmatpush1.msra.mxu0 %v356
  %1604 = vmatprep.subr.mxu0 %v354
  %1605 = vmatpush1.msra.mxu0 %v353
  %1606 = vmatprep.subr.mxu0 %v351
  %1607 = vmatpush1.msra.mxu0 %v350
  %1608 = vmatprep.subr.mxu0 %v348
  %1609 = vmatpush1.msra.mxu0 %v347
  %1610 = vmatprep.subr.mxu0 %v345
  %1611 = vmatpush1.msra.mxu0 %v344
  %1612 = vmatprep.subr.mxu0 %v342
  %1613 = vmatpush1.msra.mxu0 %v341
  %1614 = vmatprep.subr.mxu0 %v339
  %1615 = vmatpush1.msra.mxu0 %v338
  %1616 = vmatprep.subr.mxu0 %v336
  %1617 = vmatpush1.msra.mxu0 %v335
  %1618 = vmatprep.subr.mxu0 0.0
  %1619 = vmatpush2.msra.mxu0 0.0
  %1620 = vmatprep.subr.mxu0 0.0
  %1621 = vmatpush2.msra.mxu0 0.0
  %1622 = vmatprep.subr.mxu0 0.0
  %1623 = vmatpush2.msra.mxu0 0.0
  %1624 = vmatprep.subr.mxu0 0.0
  %1625 = vmatpush2.msra.mxu0 0.0
  %1626 = vmatprep.subr.mxu0 0.0
  %1627 = vmatpush2.msra.mxu0 0.0
  %1628 = vmatprep.subr.mxu0 0.0
  %1629 = vmatpush2.msra.mxu0 0.0
  %1630 = vmatprep.subr.mxu0 0.0
  %1631 = vmatpush2.msra.mxu0 0.0
  %1632 = vmatprep.subr.mxu0 0.0
  %1633 = vmatpush2.msra.mxu0 0.0
  %1634 = vmatprep.subr.mxu0 0.0
  %1635 = vmatpush2.msra.mxu0 0.0
  %1636 = vmatprep.subr.mxu0 0.0
  %1637 = vmatpush2.msra.mxu0 0.0
  %1638 = vmatprep.subr.mxu0 0.0
  %1639 = vmatpush2.msra.mxu0 0.0
  %1640 = vmatprep.subr.mxu0 0.0
  %1641 = vmatpush2.msra.mxu0 0.0
  %1642 = vmatprep.subr.mxu0 0.0
  %1643 = vmatpush2.msra.mxu0 0.0
  %1644 = vmatprep.subr.mxu0 0.0
  %1645 = vmatpush2.msra.mxu0 0.0
  %1646 = vmatprep.subr.mxu0 0.0
  %1647 = vmatpush2.msra.mxu0 0.0
  %1648 = vmatprep.subr.mxu0 0.0
  %1649 = vmatpush2.msra.mxu0 0.0
  %1650 = vmatprep.mubr.f32.mxu0 0.0
  %1651 = vmatmul.mubr.f32.gmra.mxu0 %v1577
  %v1652 = vpop.f32.mrf.mxu0
  %v1653 = vadd.f32 0.0, %v1652
  %v1654 = vpop.f32.mrf.mxu0
  %v1655 = vadd.f32 0.0, %v1654
  %1656 = vdwg.mxu0
  %1657 = vmatprep.subr.mxu0 0.0
  %1658 = vmatpush1.msra.mxu0 %v382
  %1659 = vmatprep.subr.mxu0 0.0
  %1660 = vmatpush1.msra.mxu0 %v379
  %1661 = vmatprep.subr.mxu0 0.0
  %1662 = vmatpush1.msra.mxu0 %v376
  %1663 = vmatprep.subr.mxu0 0.0
  %1664 = vmatpush1.msra.mxu0 %v373
  %1665 = vmatprep.subr.mxu0 0.0
  %1666 = vmatpush1.msra.mxu0 %v370
  %1667 = vmatprep.subr.mxu0 0.0
  %1668 = vmatpush1.msra.mxu0 %v367
  %1669 = vmatprep.subr.mxu0 0.0
  %1670 = vmatpush1.msra.mxu0 %v364
  %1671 = vmatprep.subr.mxu0 0.0
  %1672 = vmatpush1.msra.mxu0 %v361
  %1673 = vmatprep.subr.mxu0 0.0
  %1674 = vmatpush1.msra.mxu0 %v358
  %1675 = vmatprep.subr.mxu0 0.0
  %1676 = vmatpush1.msra.mxu0 %v355
  %1677 = vmatprep.subr.mxu0 0.0
  %1678 = vmatpush1.msra.mxu0 %v352
  %1679 = vmatprep.subr.mxu0 0.0
  %1680 = vmatpush1.msra.mxu0 %v349
  %1681 = vmatprep.subr.mxu0 0.0
  %1682 = vmatpush1.msra.mxu0 %v346
  %1683 = vmatprep.subr.mxu0 0.0
  %1684 = vmatpush1.msra.mxu0 %v343
  %1685 = vmatprep.subr.mxu0 0.0
  %1686 = vmatpush1.msra.mxu0 %v340
  %1687 = vmatprep.subr.mxu0 0.0
  %1688 = vmatpush1.msra.mxu0 %v337
  %1689 = vmatprep.subr.mxu0 0.0
  %1690 = vmatpush2.msra.mxu0 0.0
  %1691 = vmatprep.subr.mxu0 0.0
  %1692 = vmatpush2.msra.mxu0 0.0
  %1693 = vmatprep.subr.mxu0 0.0
  %1694 = vmatpush2.msra.mxu0 0.0
  %1695 = vmatprep.subr.mxu0 0.0
  %1696 = vmatpush2.msra.mxu0 0.0
  %1697 = vmatprep.subr.mxu0 0.0
  %1698 = vmatpush2.msra.mxu0 0.0
  %1699 = vmatprep.subr.mxu0 0.0
  %1700 = vmatpush2.msra.mxu0 0.0
  %1701 = vmatprep.subr.mxu0 0.0
  %1702 = vmatpush2.msra.mxu0 0.0
  %1703 = vmatprep.subr.mxu0 0.0
  %1704 = vmatpush2.msra.mxu0 0.0
  %1705 = vmatprep.subr.mxu0 0.0
  %1706 = vmatpush2.msra.mxu0 0.0
  %1707 = vmatprep.subr.mxu0 0.0
  %1708 = vmatpush2.msra.mxu0 0.0
  %1709 = vmatprep.subr.mxu0 0.0
  %1710 = vmatpush2.msra.mxu0 0.0
  %1711 = vmatprep.subr.mxu0 0.0
  %1712 = vmatpush2.msra.mxu0 0.0
  %1713 = vmatprep.subr.mxu0 0.0
  %1714 = vmatpush2.msra.mxu0 0.0
  %1715 = vmatprep.subr.mxu0 0.0
  %1716 = vmatpush2.msra.mxu0 0.0
  %1717 = vmatprep.subr.mxu0 0.0
  %1718 = vmatpush2.msra.mxu0 0.0
  %1719 = vmatprep.subr.mxu0 0.0
  %1720 = vmatpush2.msra.mxu0 0.0
  %1721 = vmatprep.mubr.f32.mxu0 0.0
  %1722 = vmatmul.mubr.f32.gmra.mxu0 %v1577
  %v1723 = vpop.f32.mrf.mxu0
  %v1724 = vadd.f32 0.0, %v1723
  %v1725 = vpop.f32.mrf.mxu0
  %1726 = vdwg.mxu0
  %v1727 = vadd.f32 %v1583, %v1653
  %v1728 = vxor.u32 %v1727, 2147483648
  %v1729 = vmul.f32 %v1728, 1.442695
  %v1730 = vpow.pop %v1729
  %v1731 = vadd.f32 %v1730, 1.0
  %v1732 = vrcp.pop %v1731
  %v1733 = vmul.f32 1.0, %v1732
  %v1734 = vadd.f32 %v1584, %v1655
  %v1735 = vxor.u32 %v1734, 2147483648
  %v1736 = vmul.f32 %v1735, 1.442695
  %v1737 = vpow.pop %v1736
  %v1738 = vadd.f32 %v1737, 1.0
  %v1739 = vrcp.pop %v1738
  %v1740 = vmul.f32 1.0, %v1739
  %v1741 = vadd.f32 %v1724, %v388
  %v1742 = vmul.f32 %v1733, %v1741
  %v1743 = vadd.f32 %v1585, %v1742
  %v1744 = vtanh.pop %v1743
  %v1745 = vsub.f32 %v1577, %v1744
  %v1746 = vmul.f32 %v1740, %v1745
  %v1747 = vadd.f32 %v1744, %v1746
  %s1748 = scalar_lea.vmem [#allocation4], 56
  %1749 = vst [vmem:[%s1748] sm:$0xff] %v1747
  %1750 = vst [vmem:[#allocation2] sm:$0xff] %v1747
  %v1751 = vld [vmem:[#allocation4] sm:$0xff]
  %v1752 = vld [vmem:[#allocation4 + $0x8] sm:$0xff]
  %v1753 = vld [vmem:[#allocation4 + $0x10] sm:$0xff]
  %v1754 = vld [vmem:[#allocation4 + $0x18] sm:$0xff]
  %v1755 = vld [vmem:[#allocation4 + $0x20] sm:$0xff]
  %v1756 = vld [vmem:[#allocation4 + $0x28] sm:$0xff]
  %v1757 = vld [vmem:[#allocation4 + $0x30] sm:$0xff]
  %v1758 = vld [vmem:[#allocation4 + $0x38] sm:$0xff]
  %v1759 = vld [vmem:[%s5] sm:$0xff]
  %v1760 = vld [vmem:[%s5 + $0x8] sm:$0xff]
  %v1761 = vld [vmem:[%s5 + $0x10] sm:$0xff]
  %v1762 = vld [vmem:[%s5 + $0x18] sm:$0xff]
  %v1763 = vld [vmem:[%s5 + $0x20] sm:$0xff]
  %v1764 = vld [vmem:[%s5 + $0x28] sm:$0xff]
  %v1765 = vld [vmem:[%s5 + $0x30] sm:$0xff]
  %v1766 = vld [vmem:[%s5 + $0x38] sm:$0xff]
  %v1767 = vld [vmem:[%s5 + $0x40] sm:$0xff]
  %v1768 = vld [vmem:[%s5 + $0x48] sm:$0xff]
  %v1769 = vld [vmem:[%s5 + $0x50] sm:$0xff]
  %v1770 = vld [vmem:[%s5 + $0x58] sm:$0xff]
  %v1771 = vld [vmem:[%s5 + $0x60] sm:$0xff]
  %v1772 = vld [vmem:[%s5 + $0x68] sm:$0xff]
  %v1773 = vld [vmem:[%s5 + $0x70] sm:$0xff]
  %v1774 = vld [vmem:[%s5 + $0x78] sm:$0xff]
  %v1775 = vld [vmem:[%s6] sm:$0x1]
  %v1777 = vlaneseq
  %v1778 = vshrl.u32 %v1777, 7
  %v1779 = vsub.s32 0, %v1778
  %v1780 = vrot.slane %v1775, %v1779
  %1782 = vmatprep.subr.mxu0 0.0
  %1783 = vmatpush1.msra.mxu0 %v1774
  %1784 = vmatprep.subr.mxu0 0.0
  %1785 = vmatpush1.msra.mxu0 %v1773
  %1786 = vmatprep.subr.mxu0 0.0
  %1787 = vmatpush1.msra.mxu0 %v1772
  %1788 = vmatprep.subr.mxu0 0.0
  %1789 = vmatpush1.msra.mxu0 %v1771
  %1790 = vmatprep.subr.mxu0 0.0
  %1791 = vmatpush1.msra.mxu0 %v1770
  %1792 = vmatprep.subr.mxu0 0.0
  %1793 = vmatpush1.msra.mxu0 %v1769
  %1794 = vmatprep.subr.mxu0 0.0
  %1795 = vmatpush1.msra.mxu0 %v1768
  %1796 = vmatprep.subr.mxu0 0.0
  %1797 = vmatpush1.msra.mxu0 %v1767
  %1798 = vmatprep.subr.mxu0 0.0
  %1799 = vmatpush1.msra.mxu0 %v1766
  %1800 = vmatprep.subr.mxu0 0.0
  %1801 = vmatpush1.msra.mxu0 %v1765
  %1802 = vmatprep.subr.mxu0 0.0
  %1803 = vmatpush1.msra.mxu0 %v1764
  %1804 = vmatprep.subr.mxu0 0.0
  %1805 = vmatpush1.msra.mxu0 %v1763
  %1806 = vmatprep.subr.mxu0 0.0
  %1807 = vmatpush1.msra.mxu0 %v1762
  %1808 = vmatprep.subr.mxu0 0.0
  %1809 = vmatpush1.msra.mxu0 %v1761
  %1810 = vmatprep.subr.mxu0 0.0
  %1811 = vmatpush1.msra.mxu0 %v1760
  %1812 = vmatprep.subr.mxu0 0.0
  %1813 = vmatpush1.msra.mxu0 %v1759
  %1814 = vmatprep.subr.mxu0 0.0
  %1815 = vmatpush2.msra.mxu0 0.0
  %1816 = vmatprep.subr.mxu0 0.0
  %1817 = vmatpush2.msra.mxu0 0.0
  %1818 = vmatprep.subr.mxu0 0.0
  %1819 = vmatpush2.msra.mxu0 0.0
  %1820 = vmatprep.subr.mxu0 0.0
  %1821 = vmatpush2.msra.mxu0 0.0
  %1822 = vmatprep.subr.mxu0 0.0
  %1823 = vmatpush2.msra.mxu0 0.0
  %1824 = vmatprep.subr.mxu0 0.0
  %1825 = vmatpush2.msra.mxu0 0.0
  %1826 = vmatprep.subr.mxu0 0.0
  %1827 = vmatpush2.msra.mxu0 0.0
  %1828 = vmatprep.subr.mxu0 0.0
  %1829 = vmatpush2.msra.mxu0 0.0
  %1830 = vmatprep.subr.mxu0 0.0
  %1831 = vmatpush2.msra.mxu0 0.0
  %1832 = vmatprep.subr.mxu0 0.0
  %1833 = vmatpush2.msra.mxu0 0.0
  %1834 = vmatprep.subr.mxu0 0.0
  %1835 = vmatpush2.msra.mxu0 0.0
  %1836 = vmatprep.subr.mxu0 0.0
  %1837 = vmatpush2.msra.mxu0 0.0
  %1838 = vmatprep.subr.mxu0 0.0
  %1839 = vmatpush2.msra.mxu0 0.0
  %1840 = vmatprep.subr.mxu0 0.0
  %1841 = vmatpush2.msra.mxu0 0.0
  %1842 = vmatprep.subr.mxu0 0.0
  %1843 = vmatpush2.msra.mxu0 0.0
  %1844 = vmatprep.subr.mxu0 0.0
  %1845 = vmatpush2.msra.mxu0 0.0
  %1846 = vmatprep.mubr.f32.mxu0 0.0
  %1847 = vmatmul.mubr.f32.gmra.mxu0 %v1751
  %v1848 = vpop.f32.mrf.mxu0
  %v1849 = vadd.f32 %v1780, %v1848
  %v1850 = vpop.f32.mrf.mxu0
  %1851 = vmatprep.mubr.f32.mxu0 0.0
  %1852 = vmatmul.mubr.f32.gmra.mxu0 %v1752
  %v1853 = vpop.f32.mrf.mxu0
  %v1854 = vadd.f32 %v1780, %v1853
  %v1855 = vpop.f32.mrf.mxu0
  %1856 = vmatprep.mubr.f32.mxu0 0.0
  %1857 = vmatmul.mubr.f32.gmra.mxu0 %v1753
  %v1858 = vpop.f32.mrf.mxu0
  %v1859 = vadd.f32 %v1780, %v1858
  %v1860 = vpop.f32.mrf.mxu0
  %1861 = vmatprep.mubr.f32.mxu0 0.0
  %1862 = vmatmul.mubr.f32.gmra.mxu0 %v1754
  %v1863 = vpop.f32.mrf.mxu0
  %v1864 = vadd.f32 %v1780, %v1863
  %v1865 = vpop.f32.mrf.mxu0
  %1866 = vmatprep.mubr.f32.mxu0 0.0
  %1867 = vmatmul.mubr.f32.gmra.mxu0 %v1755
  %v1868 = vpop.f32.mrf.mxu0
  %v1869 = vadd.f32 %v1780, %v1868
  %v1870 = vpop.f32.mrf.mxu0
  %1871 = vmatprep.mubr.f32.mxu0 0.0
  %1872 = vmatmul.mubr.f32.gmra.mxu0 %v1756
  %v1873 = vpop.f32.mrf.mxu0
  %v1874 = vadd.f32 %v1780, %v1873
  %v1875 = vpop.f32.mrf.mxu0
  %1876 = vmatprep.mubr.f32.mxu0 0.0
  %1877 = vmatmul.mubr.f32.gmra.mxu0 %v1757
  %v1878 = vpop.f32.mrf.mxu0
  %v1879 = vadd.f32 %v1780, %v1878
  %v1880 = vpop.f32.mrf.mxu0
  %1881 = vmatprep.mubr.f32.mxu0 0.0
  %1882 = vmatmul.mubr.f32.gmra.mxu0 %v1758
  %v1883 = vpop.f32.mrf.mxu0
  %v1884 = vadd.f32 %v1780, %v1883
  %v1885 = vpop.f32.mrf.mxu0
  %1886 = vdwg.mxu0
  %v1887 = vtanh.pop %v1849
  %v1888 = vtanh.pop %v1854
  %v1889 = vtanh.pop %v1859
  %v1890 = vtanh.pop %v1864
  %v1891 = vtanh.pop %v1869
  %v1892 = vtanh.pop %v1874
  %v1893 = vtanh.pop %v1879
  %v1894 = vtanh.pop %v1884
  %1895 = vst [vmem:[%s7] sm:$0xff] %v1887
  %1896 = vst [vmem:[%s7 + $0x8] sm:$0xff] %v1888
  %1897 = vst [vmem:[%s7 + $0x10] sm:$0xff] %v1889
  %1898 = vst [vmem:[%s7 + $0x18] sm:$0xff] %v1890
  %1899 = vst [vmem:[%s7 + $0x20] sm:$0xff] %v1891
  %1900 = vst [vmem:[%s7 + $0x28] sm:$0xff] %v1892
  %1901 = vst [vmem:[%s7 + $0x30] sm:$0xff] %v1893
  %1902 = vst [vmem:[%s7 + $0x38] sm:$0xff] %v1894
  // Predicated region
  $region34: #{my_gru_forward.1} parent=0 // pred_check
    _
  $region35: #{my_gru_forward.1} parent=0 // pred_check_branch
    %1904 = sbr.rel (0) target = $region37
  $region36: #{my_gru_forward.1} parent=0 // pred_region
    _
  $region37: #{my_gru_forward.1} parent=0 // pred_fallthru
    _
  // Predicated region
  $region38: #{my_gru_forward.1} parent=0 // pred_check
    _
  $region39: #{my_gru_forward.1} parent=0 // pred_check_branch
    %1906 = sbr.rel (0) target = $region41
  $region40: #{my_gru_forward.1} parent=0 // pred_region
    _
  $region41: #{my_gru_forward.1} parent=0 // pred_fallthru
    _

</llo_original>
